<compile_context>
chip_gen: v7x
topology: tpu7x:2x2x1
jax: 0.10.0
libtpu: 0.0.40
codegen_flags: <defaults>
</compile_context>

<pallas_src>
import numpy as np
import jax
import jax.numpy as jnp
from jax import lax
from jax.experimental import pallas as pl
from jax.experimental.pallas import tpu as pltpu


def _round_up(x, m):
    return (x + m - 1) // m * m


# ---------------------------------------------------------------------------
# Pallas kernel: WeightNet MLP + masked depthwise mean + pointwise linear
# (features on sublanes, query points on the 128-lane axis)
# ---------------------------------------------------------------------------
def _sep_pointconv_kernel(x_ref, v_ref, sc_ref,
                          w1_ref, w2_ref, b2_ref, w3_ref, b3_ref,
                          swt_ref, bp_ref, out_ref):
    f32 = jnp.float32
    bf16 = jnp.bfloat16

    # WeightNet, block-diagonal over the K neighbors (kron(w.T, I_K) built in glue).
    # BN(eval) is folded into the weights; layer-1 bias is folded via the ones-row in x.
    # MXU operands bf16, accumulation f32; elementwise math f32 (v5e-safe).
    x = x_ref[...]                                                           # (D*K+1, T) bf16
    h = jnp.dot(w1_ref[...], x, preferred_element_type=f32)                  # (H*K, T) f32
    h = h * jax.nn.sigmoid(h)                                                # Swish
    h = jnp.dot(w2_ref[...], h.astype(bf16), preferred_element_type=f32) + b2_ref[...]
    h = h * jax.nn.sigmoid(h)
    w = jnp.dot(w3_ref[...], h.astype(bf16), preferred_element_type=f32) + b3_ref[...]
    w = w * jax.nn.sigmoid(w)                                                # (Cin*K, T)

    # Neighbor values are pre-masked to exactly 0 in glue, so invalid neighbors contribute
    # 0 regardless of the (finite) WeightNet output -> per-layer masking not needed here.
    prod = (w * v_ref[...].astype(f32)).astype(bf16)                         # (Cin*K, T)

    # Sum over K and the pointwise nn.Linear fused into one small matmul:
    #   SWT[o, c*K + k] = wp[c, o]   (built in glue)
    out = jnp.dot(swt_ref[...], prod, preferred_element_type=f32)            # (Cout, T)
    # per-query scale = query_mask / max(count,1) applied on the small (Cout,T) result;
    # pointwise bias added afterwards (matches the original op order exactly).
    out_ref[...] = out * sc_ref[...] + bp_ref[...]                           # lane-dense store


# ---------------------------------------------------------------------------
# Glue: knn indices, feature-major packing (no transposes of K-expanded arrays),
#       folded/packed weights, pallas_call wrapper
# ---------------------------------------------------------------------------
def knn_indices(coords, mask, num_nbhd):
    """coords (B,N,D), mask (B,N) -> neighbor indices (B,N,k), k = min(num_nbhd, N)."""
    B, N, _ = coords.shape
    k = min(num_nbhd, N)
    d2 = jnp.sum((coords[:, :, None, :] - coords[:, None, :, :]) ** 2, axis=-1)   # (B,N,N)
    d2 = jnp.where(mask[:, None, :], d2, 1e8)            # masked source points pushed far
    _, idx = lax.top_k(-d2, k)                            # k nearest (B,N,k)
    return idx


def pack_feature_major(coords, values, mask, idx):
    """Build the streamed kernel inputs directly in (feature, R) layout."""
    B, N, D = coords.shape
    Cin = values.shape[-1]
    K = idx.shape[-1]
    R = B * N
    f32, bf16 = jnp.float32, jnp.bfloat16

    # flat neighbor indices in (K,B,N) order so plain reshapes land k-minor / R-on-lanes
    base = (jnp.arange(B, dtype=idx.dtype) * N)[None, :, None]                # (1,B,1)
    idx_kbn = jnp.transpose(idx, (2, 0, 1)) + base                            # (K,B,N)

    coords_fm = coords.reshape(R, D).T                    # (D, R)   small (un-expanded) transpose
    values_fm = values.reshape(R, Cin).T                  # (Cin, R) small (un-expanded) transpose
    mask_flat = mask.reshape(R)

    nb_coords = coords_fm[:, idx_kbn]                     # (D,   K, B, N) gather, already fm
    nb_values = values_fm[:, idx_kbn]                     # (Cin, K, B, N)
    nb_mask = mask_flat[idx_kbn].astype(f32)              # (K, B, N)

    deltas_fm = (coords_fm.reshape(D, 1, B, N) - nb_coords).reshape(D * K, R)  # rows d*K+k
    vals_fm = (nb_values * nb_mask[None, ...]).reshape(Cin * K, R)             # pre-masked, rows c*K+k

    cnt = jnp.maximum(jnp.sum(nb_mask, axis=0), 1.0)                           # (B,N) valid count
    scale = (mask.astype(f32) / cnt).reshape(1, R)                             # mean + query-mask zeroing

    ones_row = jnp.ones((1, R), f32)                       # bias-fold row for W1T's extra column
    deltas_x = jnp.concatenate([deltas_fm, ones_row], axis=0).astype(bf16)     # (D*K+1, R)
    return deltas_x, vals_fm.astype(bf16), scale


def pack_weights(params, K):
    """Fold BN(eval) into the Linears, build block-diagonal kron(w.T, I_K) weights."""
    f32, bf16 = jnp.float32, jnp.bfloat16

    def fold(w, b, s, t):
        wf = (w * s).astype(f32)                           # (fin,fout) * (1,fout)
        bf = (b * s + t).reshape(-1).astype(f32)           # (fout,)
        return wf, bf

    w1f, b1f = fold(params["w1"], params["b1"], params["s1"], params["t1"])
    w2f, b2f = fold(params["w2"], params["b2"], params["s2"], params["t2"])
    w3f, b3f = fold(params["w3"], params["b3"], params["s3"], params["t3"])
    eye_k = jnp.eye(K, dtype=f32)
    # rows j*K+k, cols d*K+k (matches d-major/k-minor streamed packing); last col = b1 (folded)
    W1T = jnp.concatenate([jnp.kron(w1f.T, eye_k),
                           jnp.repeat(b1f, K).reshape(-1, 1)], axis=1).astype(bf16)  # (H*K, D*K+1)
    W2T = jnp.kron(w2f.T, eye_k).astype(bf16)                                        # (H*K,  H*K)
    B2 = jnp.repeat(b2f, K).reshape(-1, 1)                                           # (H*K, 1) f32
    W3T = jnp.kron(w3f.T, eye_k).astype(bf16)                                        # (Cin*K, H*K)
    B3 = jnp.repeat(b3f, K).reshape(-1, 1)                                           # (Cin*K, 1) f32
    # fused K-sum + pointwise Linear: SWT[o, c*K+k] = wp[c,o]; bf16 so all MXU ops match dtype
    SWT = jnp.repeat(params["wp"].T.astype(f32), K, axis=1).astype(bf16)             # (Cout, Cin*K)
    BP = params["bp"].reshape(-1, 1).astype(f32)                                     # (Cout, 1)
    return dict(W1T=W1T, W2T=W2T, B2=B2, W3T=W3T, B3=B3, SWT=SWT, BP=BP)


def run_depthwise_pointwise(deltas_x, vals_fm, scale, packed, cout, tile_q=2048):
    """deltas_x (D*K+1,R) bf16, vals_fm (Cin*K,R) bf16, scale (1,R) f32 -> (Cout, R) f32."""
    rows_x, R = deltas_x.shape
    rows_v = vals_fm.shape[0]
    f32 = jnp.float32

    # Query tile per grid step: multiple of 128 lanes, default 2048 (amortizes the ~0.35us
    # per-step overhead; ~7 MiB/step VMEM, fine on v5e/v6e/v7x scoped defaults).
    T_cap = _round_up(max(tile_q, 128), 128)
    R128 = _round_up(R, 128)
    if R128 <= T_cap:
        # whole problem fits in one tile; if big enough split in two so both v7x
        # TensorCores get work under dimension_semantics=("parallel",)
        T = _round_up(-(-R // 2), 128) if R128 >= 256 else R128
    else:
        T = T_cap
    R_pad = _round_up(R, T)
    grid = (R_pad // T,)

    pad = R_pad - R
    if pad:
        deltas_x = jnp.pad(deltas_x, ((0, 0), (0, pad)))
        vals_fm = jnp.pad(vals_fm, ((0, 0), (0, pad)))
        scale = jnp.pad(scale, ((0, 0), (0, pad)))   # padded lanes: scale=0 -> only BP leaks there

    def stream_spec(rows):                            # streamed over the query (lane) axis
        return pl.BlockSpec((rows, T), lambda i: (0, i))

    def resident_spec(arr):                           # weights: constant block, stays resident
        return pl.BlockSpec(arr.shape, lambda i: (0, 0))

    W1T, W2T, B2, W3T, B3, SWT, BP = (packed[k] for k in
                                      ("W1T", "W2T", "B2", "W3T", "B3", "SWT", "BP"))

    out_t = pl.pallas_call(
        _sep_pointconv_kernel,
        out_shape=jax.ShapeDtypeStruct((cout, R_pad), f32),
        grid=grid,
        in_specs=[
            stream_spec(rows_x),                       # deltas (+ones row)
            stream_spec(rows_v),                       # pre-masked neighbor values
            stream_spec(1),                            # per-query scale row
            resident_spec(W1T), resident_spec(W2T), resident_spec(B2),
            resident_spec(W3T), resident_spec(B3),
            resident_spec(SWT), resident_spec(BP),
        ],
        out_specs=pl.BlockSpec((cout, T), lambda i: (0, i)),
        compiler_params=pltpu.CompilerParams(dimension_semantics=("parallel",)),
    )(deltas_x, vals_fm, scale, W1T, W2T, B2, W3T, B3, SWT, BP)

    # NOTE: padded lanes of out_t hold BP (scale zeroed the matmul term only) -> slice first.
    return out_t[:, :R]                               # (Cout, R)


def separable_point_conv(inputs, params, num_nbhd, tile_q=2048):
    coords, values, mask = inputs
    B, N, _ = coords.shape
    Cout = params["wp"].shape[-1]
    # EuclidFartherSubsample(sampling_fraction=1.0) -> identity (all points are queries)
    idx = knn_indices(coords, mask, num_nbhd)
    K = idx.shape[-1]
    deltas_x, vals_fm, scale = pack_feature_major(coords, values, mask, idx)
    packed = pack_weights(params, K)
    out_t = run_depthwise_pointwise(deltas_x, vals_fm, scale, packed, Cout, tile_q)
    out = out_t.T.reshape(B, N, Cout)                 # module semantics: (B, N, Cout)
    return coords, out, mask


# ---------------------------------------------------------------------------
# Deterministic parameter init (BN running stats expressed as scale/shift)
# ---------------------------------------------------------------------------
def init_params(key, coords_dim, in_channels, out_channels, hidden=32, eps=1e-5):
    ks = jax.random.split(key, 7)

    def lin(k, fin, fout):
        kw, kb = jax.random.split(k)
        w = (jax.random.normal(kw, (fin, fout)) / np.sqrt(fin)).astype(jnp.float32)
        b = (0.1 * jax.random.normal(kb, (1, fout))).astype(jnp.float32)
        return w, b

    def bn(k, f):
        k1, k2, k3, k4 = jax.random.split(k, 4)
        gamma = 1.0 + 0.1 * jax.random.normal(k1, (1, f))
        beta = 0.1 * jax.random.normal(k2, (1, f))
        rmean = 0.1 * jax.random.normal(k3, (1, f))
        rvar = jnp.abs(1.0 + 0.1 * jax.random.normal(k4, (1, f)))
        scale = gamma / jnp.sqrt(jnp.maximum(rvar, eps))
        shift = beta - rmean * scale
        return scale.astype(jnp.float32), shift.astype(jnp.float32)

    w1, b1 = lin(ks[0], coords_dim, hidden);     s1, t1 = bn(ks[1], hidden)
    w2, b2 = lin(ks[2], hidden, hidden);         s2, t2 = bn(ks[3], hidden)
    w3, b3 = lin(ks[4], hidden, in_channels);    s3, t3 = bn(ks[5], in_channels)
    wp, bp = lin(ks[6], in_channels, out_channels)
    return dict(w1=w1, b1=b1, s1=s1, t1=t1,
                w2=w2, b2=b2, s2=s2, t2=t2,
                w3=w3, b3=b3, s3=s3, t3=t3,
                wp=wp, bp=bp)


# ---------------------------------------------------------------------------
# Pure-JAX reference of the ORIGINAL (unfused, f32, standard-layout) semantics
# ---------------------------------------------------------------------------
def index_points(points, idx):
    # points (B, N, ...) , idx (B, M, K) -> (B, M, K, ...)
    return jax.vmap(lambda p, i: p[i])(points, idx)


def prepare_neighborhood_std(coords, values, mask, idx):
    nbhd_coords = index_points(coords, idx)                # (B, N, k, D)
    nbhd_values = index_points(values, idx)                # (B, N, k, Cin)
    nbhd_mask = index_points(mask, idx)                    # (B, N, k)
    deltas = coords[:, :, None, :] - nbhd_coords           # (B, N, k, D)
    return deltas, nbhd_values, nbhd_mask


def reference_depthwise_pointwise(deltas, vals, nmask, qmask, p):
    m = (nmask > 0)[..., None]                              # (R,K,1)

    def lin_block(x, w, b, s, t):
        h = x @ w + b
        h = jnp.where(m, h, 0.0)                            # MaskBatchNormNd (eval) masking
        h = h * s + t
        return h * jax.nn.sigmoid(h)

    h = lin_block(deltas, p["w1"], p["b1"], p["s1"], p["t1"])
    h = lin_block(h, p["w2"], p["b2"], p["s2"], p["t2"])
    w = lin_block(h, p["w3"], p["b3"], p["s3"], p["t3"])    # (R,K,Cin)
    mw = jnp.where(m, w, 0.0)
    mv = jnp.where(m, vals, 0.0)
    conv = jnp.sum(mw * mv, axis=-2)                        # (R,Cin)
    cnt = jnp.maximum(jnp.sum(nmask.astype(jnp.float32), axis=-1, keepdims=True), 1.0)
    conv = conv / cnt                                       # mean=True
    conv = jnp.where(qmask[..., None] > 0, conv, 0.0)       # query-mask zeroing
    return conv @ p["wp"] + p["bp"]                         # pointwise Linear


if __name__ == "__main__":
    key = jax.random.PRNGKey(0)
    B, N, D = 2, 16, 2            # coords_dim=2
    Cin, Cout = 4, 8
    NUM_NBHD, HIDDEN = 8, 32

    kc, kv, km, kp = jax.random.split(key, 4)
    coords = jax.random.normal(kc, (B, N, D), jnp.float32)
    values = jax.random.normal(kv, (B, N, Cin), jnp.float32)
    mask = jax.random.uniform(km, (B, N)) > 0.2

    params = init_params(kp, D, Cin, Cout, HIDDEN)

    q_coords, out, q_mask = separable_point_conv((coords, values, mask), params, NUM_NBHD)
    out = jax.block_until_ready(out)

    # correctness check of the kernelized portion against the unfused f32 reference
    idx = knn_indices(coords, mask, NUM_NBHD)
    K = idx.shape[-1]
    deltas, nvals, nmask = prepare_neighborhood_std(coords, values, mask, idx)
    ref = reference_depthwise_pointwise(
        deltas.reshape(B * N, K, D),
        nvals.reshape(B * N, K, Cin),
        nmask.reshape(B * N, K),
        mask.reshape(B * N),
        params).reshape(B, N, Cout)
    # tolerance reflects bf16 streaming / bf16 MXU operands vs. the f32 reference
    np.testing.assert_allclose(np.asarray(out), np.asarray(ref), rtol=5e-2, atol=5e-2)

    print("KERNEL_OK")
</pallas_src>

<mosaic_0001>
module attributes {stable_mosaic.version = 11 : i64} {
  func.func @_sep_pointconv_kernel(%arg0: i32, %arg1: memref<17x128xbf16, #tpu.memory_space<vmem>>, %arg2: memref<32x128xbf16, #tpu.memory_space<vmem>>, %arg3: memref<1x128xf32, #tpu.memory_space<vmem>>, %arg4: memref<256x17xbf16, #tpu.memory_space<vmem>>, %arg5: memref<256x256xbf16, #tpu.memory_space<vmem>>, %arg6: memref<256x1xf32, #tpu.memory_space<vmem>>, %arg7: memref<32x256xbf16, #tpu.memory_space<vmem>>, %arg8: memref<32x1xf32, #tpu.memory_space<vmem>>, %arg9: memref<8x32xbf16, #tpu.memory_space<vmem>>, %arg10: memref<8x1xf32, #tpu.memory_space<vmem>>, %arg11: memref<8x128xf32, #tpu.memory_space<vmem>>) attributes {dimension_semantics = [#tpu.dimension_semantics<parallel>], iteration_bounds = array<i64: 1>, scalar_prefetch = 0 : i64, scratch_operands = 0 : i64, tpu.core_type = #tpu.core_type<tc>, window_params = [{transform_indices = @transform_0, window_bounds = array<i64: 17, 128>}, {transform_indices = @transform_1, window_bounds = array<i64: 32, 128>}, {transform_indices = @transform_2, window_bounds = array<i64: 1, 128>}, {pipeline_mode = #tpu.pipeline_mode<synchronous>, transform_indices = @transform_3, window_bounds = array<i64: 256, 17>}, {pipeline_mode = #tpu.pipeline_mode<synchronous>, transform_indices = @transform_4, window_bounds = array<i64: 256, 256>}, {pipeline_mode = #tpu.pipeline_mode<synchronous>, transform_indices = @transform_5, window_bounds = array<i64: 256, 1>}, {pipeline_mode = #tpu.pipeline_mode<synchronous>, transform_indices = @transform_6, window_bounds = array<i64: 32, 256>}, {pipeline_mode = #tpu.pipeline_mode<synchronous>, transform_indices = @transform_7, window_bounds = array<i64: 32, 1>}, {pipeline_mode = #tpu.pipeline_mode<synchronous>, transform_indices = @transform_8, window_bounds = array<i64: 8, 32>}, {pipeline_mode = #tpu.pipeline_mode<synchronous>, transform_indices = @transform_9, window_bounds = array<i64: 8, 1>}, {transform_indices = @transform_10, window_bounds = array<i64: 8, 128>}]} {
    %c0 = arith.constant 0 : index
    %c0_0 = arith.constant 0 : index
    %0 = vector.load %arg1[%c0, %c0_0] : memref<17x128xbf16, #tpu.memory_space<vmem>>, vector<17x128xbf16>
    %c0_1 = arith.constant 0 : index
    %c0_2 = arith.constant 0 : index
    %1 = vector.load %arg4[%c0_1, %c0_2] : memref<256x17xbf16, #tpu.memory_space<vmem>>, vector<256x17xbf16>
    %cst = arith.constant dense<0.000000e+00> : vector<256x128xf32>
    %2 = tpu.matmul %1, %0, %cst {dimension_numbers = #tpu.dot_dimension_numbers<[1], [0], [0], [1], [0, 0, 1, 1], [], []>} : vector<256x17xbf16>, vector<17x128xbf16>, vector<256x128xf32> -> vector<256x128xf32>
    %3 = arith.negf %2 : vector<256x128xf32>
    %4 = math.exp %3 : vector<256x128xf32>
    %cst_3 = arith.constant 1.000000e+00 : f32
    %5 = vector.broadcast %cst_3 : f32 to vector<256x128xf32>
    %6 = arith.addf %5, %4 : vector<256x128xf32>
    %7 = arith.divf %5, %6 : vector<256x128xf32>
    %8 = arith.mulf %2, %7 : vector<256x128xf32>
    %c0_4 = arith.constant 0 : index
    %c0_5 = arith.constant 0 : index
    %9 = vector.load %arg5[%c0_4, %c0_5] : memref<256x256xbf16, #tpu.memory_space<vmem>>, vector<256x256xbf16>
    %10 = arith.truncf %8 : vector<256x128xf32> to vector<256x128xbf16>
    %cst_6 = arith.constant dense<0.000000e+00> : vector<256x128xf32>
    %11 = tpu.matmul %9, %10, %cst_6 {dimension_numbers = #tpu.dot_dimension_numbers<[1], [0], [0], [1], [0, 0, 1, 1], [], []>} : vector<256x256xbf16>, vector<256x128xbf16>, vector<256x128xf32> -> vector<256x128xf32>
    %c0_7 = arith.constant 0 : index
    %c0_8 = arith.constant 0 : index
    %12 = vector.load %arg6[%c0_7, %c0_8] : memref<256x1xf32, #tpu.memory_space<vmem>>, vector<256x1xf32>
    %13 = vector.broadcast %12 : vector<256x1xf32> to vector<256x128xf32>
    %14 = arith.addf %11, %13 : vector<256x128xf32>
    %15 = arith.negf %14 : vector<256x128xf32>
    %16 = math.exp %15 : vector<256x128xf32>
    %cst_9 = arith.constant 1.000000e+00 : f32
    %17 = vector.broadcast %cst_9 : f32 to vector<256x128xf32>
    %18 = arith.addf %17, %16 : vector<256x128xf32>
    %19 = arith.divf %17, %18 : vector<256x128xf32>
    %20 = arith.mulf %14, %19 : vector<256x128xf32>
    %c0_10 = arith.constant 0 : index
    %c0_11 = arith.constant 0 : index
    %21 = vector.load %arg7[%c0_10, %c0_11] : memref<32x256xbf16, #tpu.memory_space<vmem>>, vector<32x256xbf16>
    %22 = arith.truncf %20 : vector<256x128xf32> to vector<256x128xbf16>
    %cst_12 = arith.constant dense<0.000000e+00> : vector<32x128xf32>
    %23 = tpu.matmul %21, %22, %cst_12 {dimension_numbers = #tpu.dot_dimension_numbers<[1], [0], [0], [1], [0, 0, 1, 1], [], []>} : vector<32x256xbf16>, vector<256x128xbf16>, vector<32x128xf32> -> vector<32x128xf32>
    %c0_13 = arith.constant 0 : index
    %c0_14 = arith.constant 0 : index
    %24 = vector.load %arg8[%c0_13, %c0_14] : memref<32x1xf32, #tpu.memory_space<vmem>>, vector<32x1xf32>
    %25 = vector.broadcast %24 : vector<32x1xf32> to vector<32x128xf32>
    %26 = arith.addf %23, %25 : vector<32x128xf32>
    %27 = arith.negf %26 : vector<32x128xf32>
    %28 = math.exp %27 : vector<32x128xf32>
    %cst_15 = arith.constant 1.000000e+00 : f32
    %29 = vector.broadcast %cst_15 : f32 to vector<32x128xf32>
    %30 = arith.addf %29, %28 : vector<32x128xf32>
    %31 = arith.divf %29, %30 : vector<32x128xf32>
    %32 = arith.mulf %26, %31 : vector<32x128xf32>
    %c0_16 = arith.constant 0 : index
    %c0_17 = arith.constant 0 : index
    %33 = vector.load %arg2[%c0_16, %c0_17] : memref<32x128xbf16, #tpu.memory_space<vmem>>, vector<32x128xbf16>
    %34 = arith.extf %33 : vector<32x128xbf16> to vector<32x128xf32>
    %35 = arith.mulf %32, %34 : vector<32x128xf32>
    %36 = arith.truncf %35 : vector<32x128xf32> to vector<32x128xbf16>
    %c0_18 = arith.constant 0 : index
    %c0_19 = arith.constant 0 : index
    %37 = vector.load %arg9[%c0_18, %c0_19] : memref<8x32xbf16, #tpu.memory_space<vmem>>, vector<8x32xbf16>
    %cst_20 = arith.constant dense<0.000000e+00> : vector<8x128xf32>
    %38 = tpu.matmul %37, %36, %cst_20 {dimension_numbers = #tpu.dot_dimension_numbers<[1], [0], [0], [1], [0, 0, 1, 1], [], []>} : vector<8x32xbf16>, vector<32x128xbf16>, vector<8x128xf32> -> vector<8x128xf32>
    %c0_21 = arith.constant 0 : index
    %c0_22 = arith.constant 0 : index
    %39 = vector.load %arg3[%c0_21, %c0_22] : memref<1x128xf32, #tpu.memory_space<vmem>>, vector<1x128xf32>
    %40 = vector.broadcast %39 : vector<1x128xf32> to vector<8x128xf32>
    %41 = arith.mulf %38, %40 : vector<8x128xf32>
    %c0_23 = arith.constant 0 : index
    %c0_24 = arith.constant 0 : index
    %42 = vector.load %arg10[%c0_23, %c0_24] : memref<8x1xf32, #tpu.memory_space<vmem>>, vector<8x1xf32>
    %43 = vector.broadcast %42 : vector<8x1xf32> to vector<8x128xf32>
    %44 = arith.addf %41, %43 : vector<8x128xf32>
    %c0_25 = arith.constant 0 : index
    %c0_26 = arith.constant 0 : index
    %45 = vector.load %arg11[%c0_25, %c0_26] : memref<8x128xf32, #tpu.memory_space<vmem>>, vector<8x128xf32>
    tpu.vector_store %arg11[%c0_25, %c0_26], %44 {strides = array<i32>} : memref<8x128xf32, #tpu.memory_space<vmem>>, vector<8x128xf32>,
    return
  }
  func.func @transform_0(%arg0: i32) -> (i32, i32) {
    %c0_i32 = arith.constant 0 : i32
    %c0_i32_0 = arith.constant 0 : i32
    return %c0_i32, %arg0 : i32, i32
  }
  func.func @transform_1(%arg0: i32) -> (i32, i32) {
    %c0_i32 = arith.constant 0 : i32
    %c0_i32_0 = arith.constant 0 : i32
    return %c0_i32, %arg0 : i32, i32
  }
  func.func @transform_2(%arg0: i32) -> (i32, i32) {
    %c0_i32 = arith.constant 0 : i32
    %c0_i32_0 = arith.constant 0 : i32
    return %c0_i32, %arg0 : i32, i32
  }
  func.func @transform_3(%arg0: i32) -> (i32, i32) {
    %c0_i32 = arith.constant 0 : i32
    %c0_i32_0 = arith.constant 0 : i32
    %c0_i32_1 = arith.constant 0 : i32
    return %c0_i32, %c0_i32_0 : i32, i32
  }
  func.func @transform_4(%arg0: i32) -> (i32, i32) {
    %c0_i32 = arith.constant 0 : i32
    %c0_i32_0 = arith.constant 0 : i32
    %c0_i32_1 = arith.constant 0 : i32
    return %c0_i32, %c0_i32_0 : i32, i32
  }
  func.func @transform_5(%arg0: i32) -> (i32, i32) {
    %c0_i32 = arith.constant 0 : i32
    %c0_i32_0 = arith.constant 0 : i32
    %c0_i32_1 = arith.constant 0 : i32
    return %c0_i32, %c0_i32_0 : i32, i32
  }
  func.func @transform_6(%arg0: i32) -> (i32, i32) {
    %c0_i32 = arith.constant 0 : i32
    %c0_i32_0 = arith.constant 0 : i32
    %c0_i32_1 = arith.constant 0 : i32
    return %c0_i32, %c0_i32_0 : i32, i32
  }
  func.func @transform_7(%arg0: i32) -> (i32, i32) {
    %c0_i32 = arith.constant 0 : i32
    %c0_i32_0 = arith.constant 0 : i32
    %c0_i32_1 = arith.constant 0 : i32
    return %c0_i32, %c0_i32_0 : i32, i32
  }
  func.func @transform_8(%arg0: i32) -> (i32, i32) {
    %c0_i32 = arith.constant 0 : i32
    %c0_i32_0 = arith.constant 0 : i32
    %c0_i32_1 = arith.constant 0 : i32
    return %c0_i32, %c0_i32_0 : i32, i32
  }
  func.func @transform_9(%arg0: i32) -> (i32, i32) {
    %c0_i32 = arith.constant 0 : i32
    %c0_i32_0 = arith.constant 0 : i32
    %c0_i32_1 = arith.constant 0 : i32
    return %c0_i32, %c0_i32_0 : i32, i32
  }
  func.func @transform_10(%arg0: i32) -> (i32, i32) {
    %c0_i32 = arith.constant 0 : i32
    %c0_i32_0 = arith.constant 0 : i32
    return %c0_i32, %arg0 : i32, i32
  }
}

</mosaic_0001>

<llo_original>
// kernel: tpu_custom_call.1
$region0: #{tpu_custom_call.1}
  #allocation0 [shape = 'u32[]', space=smem, size = 0x4, offset = 0x4, fixed_abs, tag = 'smem constant byte address 0x4 - core index']
  #allocation1 [shape = 'u32[144,128]{1,0:T(1,128)}', space=vmem, size = 0x12000, scoped, tag = 'internal scratch']
  %s0 = inlined_call_operand.vmem [shape: bf16[17,128], index: 0, kind: input, shape index: {}]
  %s1 = inlined_call_operand.vmem [shape: bf16[32,128], index: 1, kind: input, shape index: {}]
  %s2 = inlined_call_operand.vmem [shape: f32[1,128], index: 2, kind: input, shape index: {}]
  %s3 = inlined_call_operand.vmem [shape: bf16[256,17], index: 3, kind: input, shape index: {}]
  %s4 = inlined_call_operand.vmem [shape: bf16[256,256], index: 4, kind: input, shape index: {}]
  %s5 = inlined_call_operand.vmem [shape: f32[256,1], index: 5, kind: input, shape index: {}]
  %s6 = inlined_call_operand.vmem [shape: bf16[32,256], index: 6, kind: input, shape index: {}]
  %s7 = inlined_call_operand.vmem [shape: f32[32,1], index: 7, kind: input, shape index: {}]
  %s8 = inlined_call_operand.vmem [shape: bf16[8,32], index: 8, kind: input, shape index: {}]
  %s9 = inlined_call_operand.vmem [shape: f32[8,1], index: 9, kind: input, shape index: {}]
  %s10 = inlined_call_operand.hbm [shape: f32[8,128], index: 10, kind: output, shape index: {}]
  %s11 = sld [smem:[#allocation0]]
  $region50: #{tpu_custom_call.1} parent=0
    _
  %s13 = ssub.s32 1, %s11
  %s14 = scalar_select 0, %s13, %s11
  $region1: #{tpu_custom_call.1} parent=0
    #allocation2 [shape = 'u8[4096]{0}', space=vmem, size = 0x1000, scoped, tag = 'output window, operand 0, single buffered']
    #allocation3 [shape = 's32[1]{0}', space=sflag, size = 0x4, scoped, tag = 'scoped memory for tpu_custom_call.1']
    %15 = vsyncpa [#allocation3], 0
    // Predicated region
    $region2: #{tpu_custom_call.1} parent=1 // pred_check
      _
    $region3: #{tpu_custom_call.1} parent=1 // pred_check_branch
      %17 = sbr.rel (0) target = $region5
    $region4: #{tpu_custom_call.1} parent=1 // pred_region
      _
    $region5: #{tpu_custom_call.1} parent=1 // pred_fallthru
      _
    // Predicated region
    $region6: #{tpu_custom_call.1} parent=1 // pred_check
      _
    $region7: #{tpu_custom_call.1} parent=1 // pred_check_branch
      %19 = sbr.rel (0) target = $region9
    $region8: #{tpu_custom_call.1} parent=1 // pred_region
      _
    $region9: #{tpu_custom_call.1} parent=1 // pred_fallthru
      _
    // Predicated region
    $region10: #{tpu_custom_call.1} parent=1 // pred_check
      _
    $region11: #{tpu_custom_call.1} parent=1 // pred_check_branch
      %21 = sbr.rel (0) target = $region13
    $region12: #{tpu_custom_call.1} parent=1 // pred_region
      _
    $region13: #{tpu_custom_call.1} parent=1 // pred_fallthru
      _
    // Predicated region
    $region14: #{tpu_custom_call.1} parent=1 // pred_check
      _
    $region15: #{tpu_custom_call.1} parent=1 // pred_check_branch
      %23 = sbr.rel (0) target = $region17
    $region16: #{tpu_custom_call.1} parent=1 // pred_region
      _
    $region17: #{tpu_custom_call.1} parent=1 // pred_fallthru
      _
    // Predicated region
    $region18: #{tpu_custom_call.1} parent=1 // pred_check
      _
    $region19: #{tpu_custom_call.1} parent=1 // pred_check_branch
      %25 = sbr.rel (0) target = $region21
    $region20: #{tpu_custom_call.1} parent=1 // pred_region
      _
    $region21: #{tpu_custom_call.1} parent=1 // pred_fallthru
      _
    // Predicated region
    $region22: #{tpu_custom_call.1} parent=1 // pred_check
      _
    $region23: #{tpu_custom_call.1} parent=1 // pred_check_branch
      %27 = sbr.rel (0) target = $region25
    $region24: #{tpu_custom_call.1} parent=1 // pred_region
      _
    $region25: #{tpu_custom_call.1} parent=1 // pred_fallthru
      _
    // Predicated region
    $region26: #{tpu_custom_call.1} parent=1 // pred_check
      _
    $region27: #{tpu_custom_call.1} parent=1 // pred_check_branch
      %29 = sbr.rel (0) target = $region29
    $region28: #{tpu_custom_call.1} parent=1 // pred_region
      _
    $region29: #{tpu_custom_call.1} parent=1 // pred_fallthru
      _
    // Predicated region
    $region30: #{tpu_custom_call.1} parent=1 // pred_check
      _
    $region31: #{tpu_custom_call.1} parent=1 // pred_check_branch
      %31 = sbr.rel (0) target = $region33
    $region32: #{tpu_custom_call.1} parent=1 // pred_region
      _
    $region33: #{tpu_custom_call.1} parent=1 // pred_fallthru
      _
    // Predicated region
    $region34: #{tpu_custom_call.1} parent=1 // pred_check
      _
    $region35: #{tpu_custom_call.1} parent=1 // pred_check_branch
      %33 = sbr.rel (0) target = $region37
    $region36: #{tpu_custom_call.1} parent=1 // pred_region
      _
    $region37: #{tpu_custom_call.1} parent=1 // pred_fallthru
      _
    // Predicated region
    $region38: #{tpu_custom_call.1} parent=1 // pred_check
      _
    $region39: #{tpu_custom_call.1} parent=1 // pred_check_branch
      %35 = sbr.rel (0) target = $region41
    $region40: #{tpu_custom_call.1} parent=1 // pred_region
      _
    $region41: #{tpu_custom_call.1} parent=1 // pred_fallthru
      _
    %v37 = vld [vmem:[%s0] sm:$0xf]
    %v38 = vld [vmem:[%s0 + $0x4] sm:$0xf]
    %v39 = vld [vmem:[%s0 + $0x8] sm:$0x1]
    %v40 = vld [vmem:[%s3] sm:$0xf]
    %v41 = vld [vmem:[%s3 + $0x4] sm:$0xf]
    %v42 = vld [vmem:[%s3 + $0x8] sm:$0xf]
    %v43 = vld [vmem:[%s3 + $0xc] sm:$0xf]
    %v44 = vld [vmem:[%s3 + $0x10] sm:$0xf]
    %v45 = vld [vmem:[%s3 + $0x14] sm:$0xf]
    %v46 = vld [vmem:[%s3 + $0x18] sm:$0xf]
    %v47 = vld [vmem:[%s3 + $0x1c] sm:$0xf]
    %v48 = vld [vmem:[%s3 + $0x20] sm:$0xf]
    %v49 = vld [vmem:[%s3 + $0x24] sm:$0xf]
    %v50 = vld [vmem:[%s3 + $0x28] sm:$0xf]
    %v51 = vld [vmem:[%s3 + $0x2c] sm:$0xf]
    %v52 = vld [vmem:[%s3 + $0x30] sm:$0xf]
    %v53 = vld [vmem:[%s3 + $0x34] sm:$0xf]
    %v54 = vld [vmem:[%s3 + $0x38] sm:$0xf]
    %v55 = vld [vmem:[%s3 + $0x3c] sm:$0xf]
    %v56 = vld [vmem:[%s3 + $0x40] sm:$0xf]
    %v57 = vld [vmem:[%s3 + $0x44] sm:$0xf]
    %v58 = vld [vmem:[%s3 + $0x48] sm:$0xf]
    %v59 = vld [vmem:[%s3 + $0x4c] sm:$0xf]
    %v60 = vld [vmem:[%s3 + $0x50] sm:$0xf]
    %v61 = vld [vmem:[%s3 + $0x54] sm:$0xf]
    %v62 = vld [vmem:[%s3 + $0x58] sm:$0xf]
    %v63 = vld [vmem:[%s3 + $0x5c] sm:$0xf]
    %v64 = vld [vmem:[%s3 + $0x60] sm:$0xf]
    %v65 = vld [vmem:[%s3 + $0x64] sm:$0xf]
    %v66 = vld [vmem:[%s3 + $0x68] sm:$0xf]
    %v67 = vld [vmem:[%s3 + $0x6c] sm:$0xf]
    %v68 = vld [vmem:[%s3 + $0x70] sm:$0xf]
    %v69 = vld [vmem:[%s3 + $0x74] sm:$0xf]
    %v70 = vld [vmem:[%s3 + $0x78] sm:$0xf]
    %v71 = vld [vmem:[%s3 + $0x7c] sm:$0xf]
    %v104 = vunpack.c.l.b16 %v40
    %v105 = vunpack.c.l.b16 %v41
    %v106 = vunpack.c.l.b16 %v42
    %v107 = vunpack.c.l.b16 %v43
    %v108 = vunpack.c.l.b16 %v44
    %v109 = vunpack.c.l.b16 %v45
    %v110 = vunpack.c.l.b16 %v46
    %v111 = vunpack.c.l.b16 %v47
    %v112 = vunpack.c.l.b16 %v48
    %v113 = vunpack.c.l.b16 %v49
    %v114 = vunpack.c.l.b16 %v50
    %v115 = vunpack.c.l.b16 %v51
    %v116 = vunpack.c.l.b16 %v52
    %v117 = vunpack.c.l.b16 %v53
    %v118 = vunpack.c.l.b16 %v54
    %v119 = vunpack.c.l.b16 %v55
    %v120 = vunpack.c.l.b16 %v56
    %v121 = vunpack.c.l.b16 %v57
    %v122 = vunpack.c.l.b16 %v58
    %v123 = vunpack.c.l.b16 %v59
    %v124 = vunpack.c.l.b16 %v60
    %v125 = vunpack.c.l.b16 %v61
    %v126 = vunpack.c.l.b16 %v62
    %v127 = vunpack.c.l.b16 %v63
    %v128 = vunpack.c.l.b16 %v64
    %v129 = vunpack.c.l.b16 %v65
    %v130 = vunpack.c.l.b16 %v66
    %v131 = vunpack.c.l.b16 %v67
    %v132 = vunpack.c.l.b16 %v68
    %v133 = vunpack.c.l.b16 %v69
    %v134 = vunpack.c.l.b16 %v70
    %v135 = vunpack.c.l.b16 %v71
    %v136 = vpack.c.b16 %v105, %v104
    %v137 = vpack.c.b16 %v107, %v106
    %v138 = vpack.c.b16 %v109, %v108
    %v139 = vpack.c.b16 %v111, %v110
    %v140 = vpack.c.b16 %v113, %v112
    %v141 = vpack.c.b16 %v115, %v114
    %v142 = vpack.c.b16 %v117, %v116
    %v143 = vpack.c.b16 %v119, %v118
    %v144 = vpack.c.b16 %v121, %v120
    %v145 = vpack.c.b16 %v123, %v122
    %v146 = vpack.c.b16 %v125, %v124
    %v147 = vpack.c.b16 %v127, %v126
    %v148 = vpack.c.b16 %v129, %v128
    %v149 = vpack.c.b16 %v131, %v130
    %v150 = vpack.c.b16 %v133, %v132
    %v151 = vpack.c.b16 %v135, %v134
    %v155 = vunpack.c.l.b16 %v37
    %v156 = vunpack.c.l.b16 %v38
    %v157 = vunpack.c.l.b16 %v39
    %v158 = vpack.c.b16 %v156, %v155
    %v159 = vpack.c.b16 %v157, %v157
    %vm161 = vcmask 138240
    %v163 = vsel %vm161, %v136, 0
    %v166 = vsel %vm161, %v137, 0
    %v169 = vsel %vm161, %v138, 0
    %v172 = vsel %vm161, %v139, 0
    %v175 = vsel %vm161, %v140, 0
    %v178 = vsel %vm161, %v141, 0
    %v181 = vsel %vm161, %v142, 0
    %v184 = vsel %vm161, %v143, 0
    %v187 = vsel %vm161, %v144, 0
    %v190 = vsel %vm161, %v145, 0
    %v193 = vsel %vm161, %v146, 0
    %v196 = vsel %vm161, %v147, 0
    %v199 = vsel %vm161, %v148, 0
    %v202 = vsel %vm161, %v149, 0
    %v205 = vsel %vm161, %v150, 0
    %v208 = vsel %vm161, %v151, 0
    %vm210 = vcmask 1040384
    %v211 = vsel 0, 4294967295, 65535
    %v212 = vsel %vm210, %v211, 0
    %v214 = vand.u32 %v159, %v212
    %216 = vmatprep.subr.bf16.mxu0 0
    %217 = vmatpush1.bf16.msra.mxu0 %v158
    %218 = vmatprep.subr.bf16.mxu0 0
    %219 = vmatpush1.bf16.msra.mxu0 %v214
    %220 = vmatprep.subr.bf16.mxu0 0
    %221 = vmatpush1.bf16.msra.mxu0 0
    %222 = vmatprep.subr.bf16.mxu0 0
    %223 = vmatpush1.bf16.msra.mxu0 0
    %224 = vmatprep.subr.bf16.mxu0 0
    %225 = vmatpush1.bf16.msra.mxu0 0
    %226 = vmatprep.subr.bf16.mxu0 0
    %227 = vmatpush1.bf16.msra.mxu0 0
    %228 = vmatprep.subr.bf16.mxu0 0
    %229 = vmatpush1.bf16.msra.mxu0 0
    %230 = vmatprep.subr.bf16.mxu0 0
    %231 = vmatpush1.bf16.msra.mxu0 0
    %232 = vmatprep.subr.bf16.mxu0 0
    %233 = vmatpush1.bf16.msra.mxu0 0
    %234 = vmatprep.subr.bf16.mxu0 0
    %235 = vmatpush1.bf16.msra.mxu0 0
    %236 = vmatprep.subr.bf16.mxu0 0
    %237 = vmatpush1.bf16.msra.mxu0 0
    %238 = vmatprep.subr.bf16.mxu0 0
    %239 = vmatpush1.bf16.msra.mxu0 0
    %240 = vmatprep.subr.bf16.mxu0 0
    %241 = vmatpush1.bf16.msra.mxu0 0
    %242 = vmatprep.subr.bf16.mxu0 0
    %243 = vmatpush1.bf16.msra.mxu0 0
    %244 = vmatprep.subr.bf16.mxu0 0
    %245 = vmatpush1.bf16.msra.mxu0 0
    %246 = vmatprep.subr.bf16.mxu0 0
    %247 = vmatpush1.bf16.msra.mxu0 0
    %248 = vmatprep.mubr.bf16.mxu0 0
    %249 = vmatmul.mubr.bf16.gmra.mrb[0].mxu0 %v163
    %v250 = vpop.f32.mrb[0].mxu0
    %v251 = vadd.f32 0.0, %v250
    %v252 = vpop.f32.mrb[0].mxu0
    %v253 = vpop.f32.mrb[0].mxu0
    %v254 = vadd.f32 0.0, %v253
    %v255 = vpop.f32.mrb[0].mxu0
    %256 = vmatprep.mubr.bf16.mxu0 0
    %257 = vmatmul.mubr.bf16.gmra.mrb[0].mxu0 %v166
    %v258 = vpop.f32.mrb[0].mxu0
    %v259 = vadd.f32 0.0, %v258
    %v260 = vpop.f32.mrb[0].mxu0
    %v261 = vpop.f32.mrb[0].mxu0
    %v262 = vadd.f32 0.0, %v261
    %v263 = vpop.f32.mrb[0].mxu0
    %264 = vmatprep.mubr.bf16.mxu0 0
    %265 = vmatmul.mubr.bf16.gmra.mrb[0].mxu0 %v169
    %v266 = vpop.f32.mrb[0].mxu0
    %v267 = vadd.f32 0.0, %v266
    %v268 = vpop.f32.mrb[0].mxu0
    %v269 = vpop.f32.mrb[0].mxu0
    %v270 = vadd.f32 0.0, %v269
    %v271 = vpop.f32.mrb[0].mxu0
    %272 = vmatprep.mubr.bf16.mxu0 0
    %273 = vmatmul.mubr.bf16.gmra.mrb[0].mxu0 %v172
    %v274 = vpop.f32.mrb[0].mxu0
    %v275 = vadd.f32 0.0, %v274
    %v276 = vpop.f32.mrb[0].mxu0
    %v277 = vpop.f32.mrb[0].mxu0
    %v278 = vadd.f32 0.0, %v277
    %v279 = vpop.f32.mrb[0].mxu0
    %280 = vmatprep.mubr.bf16.mxu0 0
    %281 = vmatmul.mubr.bf16.gmra.mrb[0].mxu0 %v175
    %v282 = vpop.f32.mrb[0].mxu0
    %v283 = vadd.f32 0.0, %v282
    %v284 = vpop.f32.mrb[0].mxu0
    %v285 = vpop.f32.mrb[0].mxu0
    %v286 = vadd.f32 0.0, %v285
    %v287 = vpop.f32.mrb[0].mxu0
    %288 = vmatprep.mubr.bf16.mxu0 0
    %289 = vmatmul.mubr.bf16.gmra.mrb[0].mxu0 %v178
    %v290 = vpop.f32.mrb[0].mxu0
    %v291 = vadd.f32 0.0, %v290
    %v292 = vpop.f32.mrb[0].mxu0
    %v293 = vpop.f32.mrb[0].mxu0
    %v294 = vadd.f32 0.0, %v293
    %v295 = vpop.f32.mrb[0].mxu0
    %296 = vmatprep.mubr.bf16.mxu0 0
    %297 = vmatmul.mubr.bf16.gmra.mrb[0].mxu0 %v181
    %v298 = vpop.f32.mrb[0].mxu0
    %v299 = vadd.f32 0.0, %v298
    %v300 = vpop.f32.mrb[0].mxu0
    %v301 = vpop.f32.mrb[0].mxu0
    %v302 = vadd.f32 0.0, %v301
    %v303 = vpop.f32.mrb[0].mxu0
    %304 = vmatprep.mubr.bf16.mxu0 0
    %305 = vmatmul.mubr.bf16.gmra.mrb[0].mxu0 %v184
    %v306 = vpop.f32.mrb[0].mxu0
    %v307 = vadd.f32 0.0, %v306
    %v308 = vpop.f32.mrb[0].mxu0
    %v309 = vpop.f32.mrb[0].mxu0
    %v310 = vadd.f32 0.0, %v309
    %v311 = vpop.f32.mrb[0].mxu0
    %312 = vmatprep.mubr.bf16.mxu0 0
    %313 = vmatmul.mubr.bf16.gmra.mrb[0].mxu0 %v187
    %v314 = vpop.f32.mrb[0].mxu0
    %v315 = vadd.f32 0.0, %v314
    %v316 = vpop.f32.mrb[0].mxu0
    %v317 = vpop.f32.mrb[0].mxu0
    %v318 = vadd.f32 0.0, %v317
    %v319 = vpop.f32.mrb[0].mxu0
    %320 = vmatprep.mubr.bf16.mxu0 0
    %321 = vmatmul.mubr.bf16.gmra.mrb[0].mxu0 %v190
    %v322 = vpop.f32.mrb[0].mxu0
    %v323 = vadd.f32 0.0, %v322
    %v324 = vpop.f32.mrb[0].mxu0
    %v325 = vpop.f32.mrb[0].mxu0
    %v326 = vadd.f32 0.0, %v325
    %v327 = vpop.f32.mrb[0].mxu0
    %328 = vmatprep.mubr.bf16.mxu0 0
    %329 = vmatmul.mubr.bf16.gmra.mrb[0].mxu0 %v193
    %v330 = vpop.f32.mrb[0].mxu0
    %v331 = vadd.f32 0.0, %v330
    %v332 = vpop.f32.mrb[0].mxu0
    %v333 = vpop.f32.mrb[0].mxu0
    %v334 = vadd.f32 0.0, %v333
    %v335 = vpop.f32.mrb[0].mxu0
    %336 = vmatprep.mubr.bf16.mxu0 0
    %337 = vmatmul.mubr.bf16.gmra.mrb[0].mxu0 %v196
    %v338 = vpop.f32.mrb[0].mxu0
    %v339 = vadd.f32 0.0, %v338
    %v340 = vpop.f32.mrb[0].mxu0
    %v341 = vpop.f32.mrb[0].mxu0
    %v342 = vadd.f32 0.0, %v341
    %v343 = vpop.f32.mrb[0].mxu0
    %344 = vmatprep.mubr.bf16.mxu0 0
    %345 = vmatmul.mubr.bf16.gmra.mrb[0].mxu0 %v199
    %v346 = vpop.f32.mrb[0].mxu0
    %v347 = vadd.f32 0.0, %v346
    %v348 = vpop.f32.mrb[0].mxu0
    %v349 = vpop.f32.mrb[0].mxu0
    %v350 = vadd.f32 0.0, %v349
    %v351 = vpop.f32.mrb[0].mxu0
    %352 = vmatprep.mubr.bf16.mxu0 0
    %353 = vmatmul.mubr.bf16.gmra.mrb[0].mxu0 %v202
    %v354 = vpop.f32.mrb[0].mxu0
    %v355 = vadd.f32 0.0, %v354
    %v356 = vpop.f32.mrb[0].mxu0
    %v357 = vpop.f32.mrb[0].mxu0
    %v358 = vadd.f32 0.0, %v357
    %v359 = vpop.f32.mrb[0].mxu0
    %360 = vmatprep.mubr.bf16.mxu0 0
    %361 = vmatmul.mubr.bf16.gmra.mrb[0].mxu0 %v205
    %v362 = vpop.f32.mrb[0].mxu0
    %v363 = vadd.f32 0.0, %v362
    %v364 = vpop.f32.mrb[0].mxu0
    %v365 = vpop.f32.mrb[0].mxu0
    %v366 = vadd.f32 0.0, %v365
    %v367 = vpop.f32.mrb[0].mxu0
    %368 = vmatprep.mubr.bf16.mxu0 0
    %369 = vmatmul.mubr.bf16.gmra.mrb[0].mxu0 %v208
    %v370 = vpop.f32.mrb[0].mxu0
    %v371 = vadd.f32 0.0, %v370
    %v372 = vpop.f32.mrb[0].mxu0
    %v373 = vpop.f32.mrb[0].mxu0
    %v374 = vadd.f32 0.0, %v373
    %v375 = vpop.f32.mrb[0].mxu0
    %376 = vdwg.mxu0
    %v377 = vxor.u32 %v251, 2147483648
    %v378 = vxor.u32 %v254, 2147483648
    %v379 = vxor.u32 %v259, 2147483648
    %v380 = vxor.u32 %v262, 2147483648
    %v381 = vxor.u32 %v267, 2147483648
    %v382 = vxor.u32 %v270, 2147483648
    %v383 = vxor.u32 %v275, 2147483648
    %v384 = vxor.u32 %v278, 2147483648
    %v385 = vxor.u32 %v283, 2147483648
    %v386 = vxor.u32 %v286, 2147483648
    %v387 = vxor.u32 %v291, 2147483648
    %v388 = vxor.u32 %v294, 2147483648
    %v389 = vxor.u32 %v299, 2147483648
    %v390 = vxor.u32 %v302, 2147483648
    %v391 = vxor.u32 %v307, 2147483648
    %v392 = vxor.u32 %v310, 2147483648
    %v393 = vxor.u32 %v315, 2147483648
    %v394 = vxor.u32 %v318, 2147483648
    %v395 = vxor.u32 %v323, 2147483648
    %v396 = vxor.u32 %v326, 2147483648
    %v397 = vxor.u32 %v331, 2147483648
    %v398 = vxor.u32 %v334, 2147483648
    %v399 = vxor.u32 %v339, 2147483648
    %v400 = vxor.u32 %v342, 2147483648
    %v401 = vxor.u32 %v347, 2147483648
    %v402 = vxor.u32 %v350, 2147483648
    %v403 = vxor.u32 %v355, 2147483648
    %v404 = vxor.u32 %v358, 2147483648
    %v405 = vxor.u32 %v363, 2147483648
    %v406 = vxor.u32 %v366, 2147483648
    %v407 = vxor.u32 %v371, 2147483648
    %v408 = vxor.u32 %v374, 2147483648
    %v409 = vmul.f32 %v377, 1.442695
    %v410 = vpow.pop %v409
    %v411 = vmul.f32 %v378, 1.442695
    %v412 = vpow.pop %v411
    %v413 = vmul.f32 %v379, 1.442695
    %v414 = vpow.pop %v413
    %v415 = vmul.f32 %v380, 1.442695
    %v416 = vpow.pop %v415
    %v417 = vmul.f32 %v381, 1.442695
    %v418 = vpow.pop %v417
    %v419 = vmul.f32 %v382, 1.442695
    %v420 = vpow.pop %v419
    %v421 = vmul.f32 %v383, 1.442695
    %v422 = vpow.pop %v421
    %v423 = vmul.f32 %v384, 1.442695
    %v424 = vpow.pop %v423
    %v425 = vmul.f32 %v385, 1.442695
    %v426 = vpow.pop %v425
    %v427 = vmul.f32 %v386, 1.442695
    %v428 = vpow.pop %v427
    %v429 = vmul.f32 %v387, 1.442695
    %v430 = vpow.pop %v429
    %v431 = vmul.f32 %v388, 1.442695
    %v432 = vpow.pop %v431
    %v433 = vmul.f32 %v389, 1.442695
    %v434 = vpow.pop %v433
    %v435 = vmul.f32 %v390, 1.442695
    %v436 = vpow.pop %v435
    %v437 = vmul.f32 %v391, 1.442695
    %v438 = vpow.pop %v437
    %v439 = vmul.f32 %v392, 1.442695
    %v440 = vpow.pop %v439
    %v441 = vmul.f32 %v393, 1.442695
    %v442 = vpow.pop %v441
    %v443 = vmul.f32 %v394, 1.442695
    %v444 = vpow.pop %v443
    %v445 = vmul.f32 %v395, 1.442695
    %v446 = vpow.pop %v445
    %v447 = vmul.f32 %v396, 1.442695
    %v448 = vpow.pop %v447
    %v449 = vmul.f32 %v397, 1.442695
    %v450 = vpow.pop %v449
    %v451 = vmul.f32 %v398, 1.442695
    %v452 = vpow.pop %v451
    %v453 = vmul.f32 %v399, 1.442695
    %v454 = vpow.pop %v453
    %v455 = vmul.f32 %v400, 1.442695
    %v456 = vpow.pop %v455
    %v457 = vmul.f32 %v401, 1.442695
    %v458 = vpow.pop %v457
    %v459 = vmul.f32 %v402, 1.442695
    %v460 = vpow.pop %v459
    %v461 = vmul.f32 %v403, 1.442695
    %v462 = vpow.pop %v461
    %v463 = vmul.f32 %v404, 1.442695
    %v464 = vpow.pop %v463
    %v465 = vmul.f32 %v405, 1.442695
    %v466 = vpow.pop %v465
    %v467 = vmul.f32 %v406, 1.442695
    %v468 = vpow.pop %v467
    %v469 = vmul.f32 %v407, 1.442695
    %v470 = vpow.pop %v469
    %v471 = vmul.f32 %v408, 1.442695
    %v472 = vpow.pop %v471
    %v473 = vadd.f32 %v410, 1.0
    %v474 = vadd.f32 %v412, 1.0
    %v475 = vadd.f32 %v414, 1.0
    %v476 = vadd.f32 %v416, 1.0
    %v477 = vadd.f32 %v418, 1.0
    %v478 = vadd.f32 %v420, 1.0
    %v479 = vadd.f32 %v422, 1.0
    %v480 = vadd.f32 %v424, 1.0
    %v481 = vadd.f32 %v426, 1.0
    %v482 = vadd.f32 %v428, 1.0
    %v483 = vadd.f32 %v430, 1.0
    %v484 = vadd.f32 %v432, 1.0
    %v485 = vadd.f32 %v434, 1.0
    %v486 = vadd.f32 %v436, 1.0
    %v487 = vadd.f32 %v438, 1.0
    %v488 = vadd.f32 %v440, 1.0
    %v489 = vadd.f32 %v442, 1.0
    %v490 = vadd.f32 %v444, 1.0
    %v491 = vadd.f32 %v446, 1.0
    %v492 = vadd.f32 %v448, 1.0
    %v493 = vadd.f32 %v450, 1.0
    %v494 = vadd.f32 %v452, 1.0
    %v495 = vadd.f32 %v454, 1.0
    %v496 = vadd.f32 %v456, 1.0
    %v497 = vadd.f32 %v458, 1.0
    %v498 = vadd.f32 %v460, 1.0
    %v499 = vadd.f32 %v462, 1.0
    %v500 = vadd.f32 %v464, 1.0
    %v501 = vadd.f32 %v466, 1.0
    %v502 = vadd.f32 %v468, 1.0
    %v503 = vadd.f32 %v470, 1.0
    %v504 = vadd.f32 %v472, 1.0
    %v505 = vrcp.pop %v473
    %v506 = vmul.f32 1.0, %v505
    %v507 = vrcp.pop %v474
    %v508 = vmul.f32 1.0, %v507
    %v509 = vrcp.pop %v475
    %v510 = vmul.f32 1.0, %v509
    %v511 = vrcp.pop %v476
    %v512 = vmul.f32 1.0, %v511
    %v513 = vrcp.pop %v477
    %v514 = vmul.f32 1.0, %v513
    %v515 = vrcp.pop %v478
    %v516 = vmul.f32 1.0, %v515
    %v517 = vrcp.pop %v479
    %v518 = vmul.f32 1.0, %v517
    %v519 = vrcp.pop %v480
    %v520 = vmul.f32 1.0, %v519
    %v521 = vrcp.pop %v481
    %v522 = vmul.f32 1.0, %v521
    %v523 = vrcp.pop %v482
    %v524 = vmul.f32 1.0, %v523
    %v525 = vrcp.pop %v483
    %v526 = vmul.f32 1.0, %v525
    %v527 = vrcp.pop %v484
    %v528 = vmul.f32 1.0, %v527
    %v529 = vrcp.pop %v485
    %v530 = vmul.f32 1.0, %v529
    %v531 = vrcp.pop %v486
    %v532 = vmul.f32 1.0, %v531
    %v533 = vrcp.pop %v487
    %v534 = vmul.f32 1.0, %v533
    %v535 = vrcp.pop %v488
    %v536 = vmul.f32 1.0, %v535
    %v537 = vrcp.pop %v489
    %v538 = vmul.f32 1.0, %v537
    %v539 = vrcp.pop %v490
    %v540 = vmul.f32 1.0, %v539
    %v541 = vrcp.pop %v491
    %v542 = vmul.f32 1.0, %v541
    %v543 = vrcp.pop %v492
    %v544 = vmul.f32 1.0, %v543
    %v545 = vrcp.pop %v493
    %v546 = vmul.f32 1.0, %v545
    %v547 = vrcp.pop %v494
    %v548 = vmul.f32 1.0, %v547
    %v549 = vrcp.pop %v495
    %v550 = vmul.f32 1.0, %v549
    %v551 = vrcp.pop %v496
    %v552 = vmul.f32 1.0, %v551
    %v553 = vrcp.pop %v497
    %v554 = vmul.f32 1.0, %v553
    %v555 = vrcp.pop %v498
    %v556 = vmul.f32 1.0, %v555
    %v557 = vrcp.pop %v499
    %v558 = vmul.f32 1.0, %v557
    %v559 = vrcp.pop %v500
    %v560 = vmul.f32 1.0, %v559
    %v561 = vrcp.pop %v501
    %v562 = vmul.f32 1.0, %v561
    %v563 = vrcp.pop %v502
    %v564 = vmul.f32 1.0, %v563
    %v565 = vrcp.pop %v503
    %v566 = vmul.f32 1.0, %v565
    %v567 = vrcp.pop %v504
    %v568 = vmul.f32 1.0, %v567
    %v569 = vmul.f32 %v251, %v506
    %v570 = vmul.f32 %v254, %v508
    %v571 = vmul.f32 %v259, %v510
    %v572 = vmul.f32 %v262, %v512
    %v573 = vmul.f32 %v267, %v514
    %v574 = vmul.f32 %v270, %v516
    %v575 = vmul.f32 %v275, %v518
    %v576 = vmul.f32 %v278, %v520
    %v577 = vmul.f32 %v283, %v522
    %v578 = vmul.f32 %v286, %v524
    %v579 = vmul.f32 %v291, %v526
    %v580 = vmul.f32 %v294, %v528
    %v581 = vmul.f32 %v299, %v530
    %v582 = vmul.f32 %v302, %v532
    %v583 = vmul.f32 %v307, %v534
    %v584 = vmul.f32 %v310, %v536
    %v585 = vmul.f32 %v315, %v538
    %v586 = vmul.f32 %v318, %v540
    %v587 = vmul.f32 %v323, %v542
    %v588 = vmul.f32 %v326, %v544
    %v589 = vmul.f32 %v331, %v546
    %v590 = vmul.f32 %v334, %v548
    %v591 = vmul.f32 %v339, %v550
    %v592 = vmul.f32 %v342, %v552
    %v593 = vmul.f32 %v347, %v554
    %v594 = vmul.f32 %v350, %v556
    %v595 = vmul.f32 %v355, %v558
    %v596 = vmul.f32 %v358, %v560
    %v597 = vmul.f32 %v363, %v562
    %v598 = vmul.f32 %v366, %v564
    %v599 = vmul.f32 %v371, %v566
    %v600 = vmul.f32 %v374, %v568
    %v601 = vld [vmem:[%s4] sm:$0xff]
    %v602 = vld [vmem:[%s4 + $0x8] sm:$0xff]
    %v603 = vld [vmem:[%s4 + $0x10] sm:$0xff]
    %v604 = vld [vmem:[%s4 + $0x18] sm:$0xff]
    %v605 = vld [vmem:[%s4 + $0x20] sm:$0xff]
    %v606 = vld [vmem:[%s4 + $0x28] sm:$0xff]
    %v607 = vld [vmem:[%s4 + $0x30] sm:$0xff]
    %v608 = vld [vmem:[%s4 + $0x38] sm:$0xff]
    %v609 = vld [vmem:[%s4 + $0x40] sm:$0xff]
    %v610 = vld [vmem:[%s4 + $0x48] sm:$0xff]
    %v611 = vld [vmem:[%s4 + $0x50] sm:$0xff]
    %v612 = vld [vmem:[%s4 + $0x58] sm:$0xff]
    %v613 = vld [vmem:[%s4 + $0x60] sm:$0xff]
    %v614 = vld [vmem:[%s4 + $0x68] sm:$0xff]
    %v615 = vld [vmem:[%s4 + $0x70] sm:$0xff]
    %v616 = vld [vmem:[%s4 + $0x78] sm:$0xff]
    %v617 = vld [vmem:[%s4 + $0x80] sm:$0xff]
    %v618 = vld [vmem:[%s4 + $0x88] sm:$0xff]
    %v619 = vld [vmem:[%s4 + $0x90] sm:$0xff]
    %v620 = vld [vmem:[%s4 + $0x98] sm:$0xff]
    %v621 = vld [vmem:[%s4 + $0xa0] sm:$0xff]
    %v622 = vld [vmem:[%s4 + $0xa8] sm:$0xff]
    %v623 = vld [vmem:[%s4 + $0xb0] sm:$0xff]
    %v624 = vld [vmem:[%s4 + $0xb8] sm:$0xff]
    %v625 = vld [vmem:[%s4 + $0xc0] sm:$0xff]
    %v626 = vld [vmem:[%s4 + $0xc8] sm:$0xff]
    %v627 = vld [vmem:[%s4 + $0xd0] sm:$0xff]
    %v628 = vld [vmem:[%s4 + $0xd8] sm:$0xff]
    %v629 = vld [vmem:[%s4 + $0xe0] sm:$0xff]
    %v630 = vld [vmem:[%s4 + $0xe8] sm:$0xff]
    %v631 = vld [vmem:[%s4 + $0xf0] sm:$0xff]
    %v632 = vld [vmem:[%s4 + $0xf8] sm:$0xff]
    %v633 = vpack.c.bf16 %v570, %v569
    %v634 = vpack.c.bf16 %v572, %v571
    %v635 = vpack.c.bf16 %v574, %v573
    %v636 = vpack.c.bf16 %v576, %v575
    %v637 = vpack.c.bf16 %v578, %v577
    %v638 = vpack.c.bf16 %v580, %v579
    %v639 = vpack.c.bf16 %v582, %v581
    %v640 = vpack.c.bf16 %v584, %v583
    %v641 = vpack.c.bf16 %v586, %v585
    %v642 = vpack.c.bf16 %v588, %v587
    %v643 = vpack.c.bf16 %v590, %v589
    %v644 = vpack.c.bf16 %v592, %v591
    %v645 = vpack.c.bf16 %v594, %v593
    %v646 = vpack.c.bf16 %v596, %v595
    %v647 = vpack.c.bf16 %v598, %v597
    %v648 = vpack.c.bf16 %v600, %v599
    %v649 = vld [vmem:[%s5] sm:$0xff]
    %v650 = vld [vmem:[%s5 + $0x8] sm:$0xff]
    %v651 = vld [vmem:[%s5 + $0x10] sm:$0xff]
    %v652 = vld [vmem:[%s5 + $0x18] sm:$0xff]
    %v653 = vld [vmem:[%s5 + $0x20] sm:$0xff]
    %v654 = vld [vmem:[%s5 + $0x28] sm:$0xff]
    %v655 = vld [vmem:[%s5 + $0x30] sm:$0xff]
    %v656 = vld [vmem:[%s5 + $0x38] sm:$0xff]
    %v657 = vld [vmem:[%s5 + $0x40] sm:$0xff]
    %v658 = vld [vmem:[%s5 + $0x48] sm:$0xff]
    %v659 = vld [vmem:[%s5 + $0x50] sm:$0xff]
    %v660 = vld [vmem:[%s5 + $0x58] sm:$0xff]
    %v661 = vld [vmem:[%s5 + $0x60] sm:$0xff]
    %v662 = vld [vmem:[%s5 + $0x68] sm:$0xff]
    %v663 = vld [vmem:[%s5 + $0x70] sm:$0xff]
    %v664 = vld [vmem:[%s5 + $0x78] sm:$0xff]
    %v665 = vld [vmem:[%s5 + $0x80] sm:$0xff]
    %v666 = vld [vmem:[%s5 + $0x88] sm:$0xff]
    %v667 = vld [vmem:[%s5 + $0x90] sm:$0xff]
    %v668 = vld [vmem:[%s5 + $0x98] sm:$0xff]
    %v669 = vld [vmem:[%s5 + $0xa0] sm:$0xff]
    %v670 = vld [vmem:[%s5 + $0xa8] sm:$0xff]
    %v671 = vld [vmem:[%s5 + $0xb0] sm:$0xff]
    %v672 = vld [vmem:[%s5 + $0xb8] sm:$0xff]
    %v673 = vld [vmem:[%s5 + $0xc0] sm:$0xff]
    %v674 = vld [vmem:[%s5 + $0xc8] sm:$0xff]
    %v675 = vld [vmem:[%s5 + $0xd0] sm:$0xff]
    %v676 = vld [vmem:[%s5 + $0xd8] sm:$0xff]
    %v677 = vld [vmem:[%s5 + $0xe0] sm:$0xff]
    %v678 = vld [vmem:[%s5 + $0xe8] sm:$0xff]
    %v679 = vld [vmem:[%s5 + $0xf0] sm:$0xff]
    %v680 = vld [vmem:[%s5 + $0xf8] sm:$0xff]
    %682 = vset.pattern.permute.xlu0 0
    %683 = vperm.xlu0 %682, %v649
    %v684 = vpop.permute.xlu0 %683
    %687 = vset.pattern.permute.xlu0 0
    %688 = vperm.xlu0 %687, %v650
    %v689 = vpop.permute.xlu0 %688
    %692 = vset.pattern.permute.xlu0 0
    %693 = vperm.xlu0 %692, %v651
    %v694 = vpop.permute.xlu0 %693
    %697 = vset.pattern.permute.xlu0 0
    %698 = vperm.xlu0 %697, %v652
    %v699 = vpop.permute.xlu0 %698
    %702 = vset.pattern.permute.xlu0 0
    %703 = vperm.xlu0 %702, %v653
    %v704 = vpop.permute.xlu0 %703
    %707 = vset.pattern.permute.xlu0 0
    %708 = vperm.xlu0 %707, %v654
    %v709 = vpop.permute.xlu0 %708
    %712 = vset.pattern.permute.xlu0 0
    %713 = vperm.xlu0 %712, %v655
    %v714 = vpop.permute.xlu0 %713
    %717 = vset.pattern.permute.xlu0 0
    %718 = vperm.xlu0 %717, %v656
    %v719 = vpop.permute.xlu0 %718
    %722 = vset.pattern.permute.xlu0 0
    %723 = vperm.xlu0 %722, %v657
    %v724 = vpop.permute.xlu0 %723
    %727 = vset.pattern.permute.xlu0 0
    %728 = vperm.xlu0 %727, %v658
    %v729 = vpop.permute.xlu0 %728
    %732 = vset.pattern.permute.xlu0 0
    %733 = vperm.xlu0 %732, %v659
    %v734 = vpop.permute.xlu0 %733
    %737 = vset.pattern.permute.xlu0 0
    %738 = vperm.xlu0 %737, %v660
    %v739 = vpop.permute.xlu0 %738
    %742 = vset.pattern.permute.xlu0 0
    %743 = vperm.xlu0 %742, %v661
    %v744 = vpop.permute.xlu0 %743
    %747 = vset.pattern.permute.xlu0 0
    %748 = vperm.xlu0 %747, %v662
    %v749 = vpop.permute.xlu0 %748
    %752 = vset.pattern.permute.xlu0 0
    %753 = vperm.xlu0 %752, %v663
    %v754 = vpop.permute.xlu0 %753
    %757 = vset.pattern.permute.xlu0 0
    %758 = vperm.xlu0 %757, %v664
    %v759 = vpop.permute.xlu0 %758
    %762 = vset.pattern.permute.xlu0 0
    %763 = vperm.xlu0 %762, %v665
    %v764 = vpop.permute.xlu0 %763
    %767 = vset.pattern.permute.xlu0 0
    %768 = vperm.xlu0 %767, %v666
    %v769 = vpop.permute.xlu0 %768
    %772 = vset.pattern.permute.xlu0 0
    %773 = vperm.xlu0 %772, %v667
    %v774 = vpop.permute.xlu0 %773
    %777 = vset.pattern.permute.xlu0 0
    %778 = vperm.xlu0 %777, %v668
    %v779 = vpop.permute.xlu0 %778
    %782 = vset.pattern.permute.xlu0 0
    %783 = vperm.xlu0 %782, %v669
    %v784 = vpop.permute.xlu0 %783
    %787 = vset.pattern.permute.xlu0 0
    %788 = vperm.xlu0 %787, %v670
    %v789 = vpop.permute.xlu0 %788
    %792 = vset.pattern.permute.xlu0 0
    %793 = vperm.xlu0 %792, %v671
    %v794 = vpop.permute.xlu0 %793
    %797 = vset.pattern.permute.xlu0 0
    %798 = vperm.xlu0 %797, %v672
    %v799 = vpop.permute.xlu0 %798
    %802 = vset.pattern.permute.xlu0 0
    %803 = vperm.xlu0 %802, %v673
    %v804 = vpop.permute.xlu0 %803
    %807 = vset.pattern.permute.xlu0 0
    %808 = vperm.xlu0 %807, %v674
    %v809 = vpop.permute.xlu0 %808
    %812 = vset.pattern.permute.xlu0 0
    %813 = vperm.xlu0 %812, %v675
    %v814 = vpop.permute.xlu0 %813
    %817 = vset.pattern.permute.xlu0 0
    %818 = vperm.xlu0 %817, %v676
    %v819 = vpop.permute.xlu0 %818
    %822 = vset.pattern.permute.xlu0 0
    %823 = vperm.xlu0 %822, %v677
    %v824 = vpop.permute.xlu0 %823
    %827 = vset.pattern.permute.xlu0 0
    %828 = vperm.xlu0 %827, %v678
    %v829 = vpop.permute.xlu0 %828
    %832 = vset.pattern.permute.xlu0 0
    %833 = vperm.xlu0 %832, %v679
    %v834 = vpop.permute.xlu0 %833
    %837 = vset.pattern.permute.xlu0 0
    %838 = vperm.xlu0 %837, %v680
    %v839 = vpop.permute.xlu0 %838
    %v873 = vunpack.c.l.b16 %v601
    %v874 = vunpack.c.h.b16 %v601
    %v875 = vunpack.c.l.b16 %v602
    %v876 = vunpack.c.h.b16 %v602
    %v877 = vunpack.c.l.b16 %v603
    %v878 = vunpack.c.h.b16 %v603
    %v879 = vunpack.c.l.b16 %v604
    %v880 = vunpack.c.h.b16 %v604
    %v881 = vunpack.c.l.b16 %v605
    %v882 = vunpack.c.h.b16 %v605
    %v883 = vunpack.c.l.b16 %v606
    %v884 = vunpack.c.h.b16 %v606
    %v885 = vunpack.c.l.b16 %v607
    %v886 = vunpack.c.h.b16 %v607
    %v887 = vunpack.c.l.b16 %v608
    %v888 = vunpack.c.h.b16 %v608
    %v889 = vunpack.c.l.b16 %v609
    %v890 = vunpack.c.h.b16 %v609
    %v891 = vunpack.c.l.b16 %v610
    %v892 = vunpack.c.h.b16 %v610
    %v893 = vunpack.c.l.b16 %v611
    %v894 = vunpack.c.h.b16 %v611
    %v895 = vunpack.c.l.b16 %v612
    %v896 = vunpack.c.h.b16 %v612
    %v897 = vunpack.c.l.b16 %v613
    %v898 = vunpack.c.h.b16 %v613
    %v899 = vunpack.c.l.b16 %v614
    %v900 = vunpack.c.h.b16 %v614
    %v901 = vunpack.c.l.b16 %v615
    %v902 = vunpack.c.h.b16 %v615
    %v903 = vunpack.c.l.b16 %v616
    %v904 = vunpack.c.h.b16 %v616
    %v905 = vunpack.c.l.b16 %v617
    %v906 = vunpack.c.h.b16 %v617
    %v907 = vunpack.c.l.b16 %v618
    %v908 = vunpack.c.h.b16 %v618
    %v909 = vunpack.c.l.b16 %v619
    %v910 = vunpack.c.h.b16 %v619
    %v911 = vunpack.c.l.b16 %v620
    %v912 = vunpack.c.h.b16 %v620
    %v913 = vunpack.c.l.b16 %v621
    %v914 = vunpack.c.h.b16 %v621
    %v915 = vunpack.c.l.b16 %v622
    %v916 = vunpack.c.h.b16 %v622
    %v917 = vunpack.c.l.b16 %v623
    %v918 = vunpack.c.h.b16 %v623
    %v919 = vunpack.c.l.b16 %v624
    %v920 = vunpack.c.h.b16 %v624
    %v921 = vunpack.c.l.b16 %v625
    %v922 = vunpack.c.h.b16 %v625
    %v923 = vunpack.c.l.b16 %v626
    %v924 = vunpack.c.h.b16 %v626
    %v925 = vunpack.c.l.b16 %v627
    %v926 = vunpack.c.h.b16 %v627
    %v927 = vunpack.c.l.b16 %v628
    %v928 = vunpack.c.h.b16 %v628
    %v929 = vunpack.c.l.b16 %v629
    %v930 = vunpack.c.h.b16 %v629
    %v931 = vunpack.c.l.b16 %v630
    %v932 = vunpack.c.h.b16 %v630
    %v933 = vunpack.c.l.b16 %v631
    %v934 = vunpack.c.h.b16 %v631
    %v935 = vunpack.c.l.b16 %v632
    %v936 = vunpack.c.h.b16 %v632
    %v937 = vpack.c.b16 %v875, %v873
    %v938 = vpack.c.b16 %v876, %v874
    %v939 = vpack.c.b16 %v879, %v877
    %v940 = vpack.c.b16 %v880, %v878
    %v941 = vpack.c.b16 %v883, %v881
    %v942 = vpack.c.b16 %v884, %v882
    %v943 = vpack.c.b16 %v887, %v885
    %v944 = vpack.c.b16 %v888, %v886
    %v945 = vpack.c.b16 %v891, %v889
    %v946 = vpack.c.b16 %v892, %v890
    %v947 = vpack.c.b16 %v895, %v893
    %v948 = vpack.c.b16 %v896, %v894
    %v949 = vpack.c.b16 %v899, %v897
    %v950 = vpack.c.b16 %v900, %v898
    %v951 = vpack.c.b16 %v903, %v901
    %v952 = vpack.c.b16 %v904, %v902
    %v953 = vpack.c.b16 %v907, %v905
    %v954 = vpack.c.b16 %v908, %v906
    %v955 = vpack.c.b16 %v911, %v909
    %v956 = vpack.c.b16 %v912, %v910
    %v957 = vpack.c.b16 %v915, %v913
    %v958 = vpack.c.b16 %v916, %v914
    %v959 = vpack.c.b16 %v919, %v917
    %v960 = vpack.c.b16 %v920, %v918
    %v961 = vpack.c.b16 %v923, %v921
    %v962 = vpack.c.b16 %v924, %v922
    %v963 = vpack.c.b16 %v927, %v925
    %v964 = vpack.c.b16 %v928, %v926
    %v965 = vpack.c.b16 %v931, %v929
    %v966 = vpack.c.b16 %v932, %v930
    %v967 = vpack.c.b16 %v935, %v933
    %v968 = vpack.c.b16 %v936, %v934
    %1001 = vmatprep.subr.bf16.mxu0 0
    %1002 = vmatpush1.bf16.msra.mxu0 %v633
    %1003 = vmatprep.subr.bf16.mxu0 0
    %1004 = vmatpush1.bf16.msra.mxu0 %v634
    %1005 = vmatprep.subr.bf16.mxu0 0
    %1006 = vmatpush1.bf16.msra.mxu0 %v635
    %1007 = vmatprep.subr.bf16.mxu0 0
    %1008 = vmatpush1.bf16.msra.mxu0 %v636
    %1009 = vmatprep.subr.bf16.mxu0 0
    %1010 = vmatpush1.bf16.msra.mxu0 %v637
    %1011 = vmatprep.subr.bf16.mxu0 0
    %1012 = vmatpush1.bf16.msra.mxu0 %v638
    %1013 = vmatprep.subr.bf16.mxu0 0
    %1014 = vmatpush1.bf16.msra.mxu0 %v639
    %1015 = vmatprep.subr.bf16.mxu0 0
    %1016 = vmatpush1.bf16.msra.mxu0 %v640
    %1017 = vmatprep.subr.bf16.mxu0 0
    %1018 = vmatpush1.bf16.msra.mxu0 %v641
    %1019 = vmatprep.subr.bf16.mxu0 0
    %1020 = vmatpush1.bf16.msra.mxu0 %v642
    %1021 = vmatprep.subr.bf16.mxu0 0
    %1022 = vmatpush1.bf16.msra.mxu0 %v643
    %1023 = vmatprep.subr.bf16.mxu0 0
    %1024 = vmatpush1.bf16.msra.mxu0 %v644
    %1025 = vmatprep.subr.bf16.mxu0 0
    %1026 = vmatpush1.bf16.msra.mxu0 %v645
    %1027 = vmatprep.subr.bf16.mxu0 0
    %1028 = vmatpush1.bf16.msra.mxu0 %v646
    %1029 = vmatprep.subr.bf16.mxu0 0
    %1030 = vmatpush1.bf16.msra.mxu0 %v647
    %1031 = vmatprep.subr.bf16.mxu0 0
    %1032 = vmatpush1.bf16.msra.mxu0 %v648
    %1033 = vmatprep.mubr.bf16.mxu0 %v938
    %1034 = vmatmul.mubr.bf16.gmra.mrb[0].mxu0 %v937
    %v1035 = vpop.f32.mrb[0].mxu0
    %v1036 = vadd.f32 %v684, %v1035
    %v1037 = vpop.f32.mrb[0].mxu0
    %v1038 = vpop.f32.mrb[0].mxu0
    %v1039 = vadd.f32 %v689, %v1038
    %v1040 = vpop.f32.mrb[0].mxu0
    %1041 = vmatprep.mubr.bf16.mxu0 %v940
    %1042 = vmatmul.mubr.bf16.gmra.mrb[0].mxu0 %v939
    %v1043 = vpop.f32.mrb[0].mxu0
    %v1044 = vadd.f32 %v694, %v1043
    %v1045 = vpop.f32.mrb[0].mxu0
    %v1046 = vpop.f32.mrb[0].mxu0
    %v1047 = vadd.f32 %v699, %v1046
    %v1048 = vpop.f32.mrb[0].mxu0
    %1049 = vmatprep.mubr.bf16.mxu0 %v942
    %1050 = vmatmul.mubr.bf16.gmra.mrb[0].mxu0 %v941
    %v1051 = vpop.f32.mrb[0].mxu0
    %v1052 = vadd.f32 %v704, %v1051
    %v1053 = vpop.f32.mrb[0].mxu0
    %v1054 = vpop.f32.mrb[0].mxu0
    %v1055 = vadd.f32 %v709, %v1054
    %v1056 = vpop.f32.mrb[0].mxu0
    %1057 = vmatprep.mubr.bf16.mxu0 %v944
    %1058 = vmatmul.mubr.bf16.gmra.mrb[0].mxu0 %v943
    %v1059 = vpop.f32.mrb[0].mxu0
    %v1060 = vadd.f32 %v714, %v1059
    %v1061 = vpop.f32.mrb[0].mxu0
    %v1062 = vpop.f32.mrb[0].mxu0
    %v1063 = vadd.f32 %v719, %v1062
    %v1064 = vpop.f32.mrb[0].mxu0
    %1065 = vmatprep.mubr.bf16.mxu0 %v946
    %1066 = vmatmul.mubr.bf16.gmra.mrb[0].mxu0 %v945
    %v1067 = vpop.f32.mrb[0].mxu0
    %v1068 = vadd.f32 %v724, %v1067
    %v1069 = vpop.f32.mrb[0].mxu0
    %v1070 = vpop.f32.mrb[0].mxu0
    %v1071 = vadd.f32 %v729, %v1070
    %v1072 = vpop.f32.mrb[0].mxu0
    %1073 = vmatprep.mubr.bf16.mxu0 %v948
    %1074 = vmatmul.mubr.bf16.gmra.mrb[0].mxu0 %v947
    %v1075 = vpop.f32.mrb[0].mxu0
    %v1076 = vadd.f32 %v734, %v1075
    %v1077 = vpop.f32.mrb[0].mxu0
    %v1078 = vpop.f32.mrb[0].mxu0
    %v1079 = vadd.f32 %v739, %v1078
    %v1080 = vpop.f32.mrb[0].mxu0
    %1081 = vmatprep.mubr.bf16.mxu0 %v950
    %1082 = vmatmul.mubr.bf16.gmra.mrb[0].mxu0 %v949
    %v1083 = vpop.f32.mrb[0].mxu0
    %v1084 = vadd.f32 %v744, %v1083
    %v1085 = vpop.f32.mrb[0].mxu0
    %v1086 = vpop.f32.mrb[0].mxu0
    %v1087 = vadd.f32 %v749, %v1086
    %v1088 = vpop.f32.mrb[0].mxu0
    %1089 = vmatprep.mubr.bf16.mxu0 %v952
    %1090 = vmatmul.mubr.bf16.gmra.mrb[0].mxu0 %v951
    %v1091 = vpop.f32.mrb[0].mxu0
    %v1092 = vadd.f32 %v754, %v1091
    %v1093 = vpop.f32.mrb[0].mxu0
    %v1094 = vpop.f32.mrb[0].mxu0
    %v1095 = vadd.f32 %v759, %v1094
    %v1096 = vpop.f32.mrb[0].mxu0
    %1097 = vmatprep.mubr.bf16.mxu0 %v954
    %1098 = vmatmul.mubr.bf16.gmra.mrb[0].mxu0 %v953
    %v1099 = vpop.f32.mrb[0].mxu0
    %v1100 = vadd.f32 %v764, %v1099
    %v1101 = vpop.f32.mrb[0].mxu0
    %v1102 = vpop.f32.mrb[0].mxu0
    %v1103 = vadd.f32 %v769, %v1102
    %v1104 = vpop.f32.mrb[0].mxu0
    %1105 = vmatprep.mubr.bf16.mxu0 %v956
    %1106 = vmatmul.mubr.bf16.gmra.mrb[0].mxu0 %v955
    %v1107 = vpop.f32.mrb[0].mxu0
    %v1108 = vadd.f32 %v774, %v1107
    %v1109 = vpop.f32.mrb[0].mxu0
    %v1110 = vpop.f32.mrb[0].mxu0
    %v1111 = vadd.f32 %v779, %v1110
    %v1112 = vpop.f32.mrb[0].mxu0
    %1113 = vmatprep.mubr.bf16.mxu0 %v958
    %1114 = vmatmul.mubr.bf16.gmra.mrb[0].mxu0 %v957
    %v1115 = vpop.f32.mrb[0].mxu0
    %v1116 = vadd.f32 %v784, %v1115
    %v1117 = vpop.f32.mrb[0].mxu0
    %v1118 = vpop.f32.mrb[0].mxu0
    %v1119 = vadd.f32 %v789, %v1118
    %v1120 = vpop.f32.mrb[0].mxu0
    %1121 = vmatprep.mubr.bf16.mxu0 %v960
    %1122 = vmatmul.mubr.bf16.gmra.mrb[0].mxu0 %v959
    %v1123 = vpop.f32.mrb[0].mxu0
    %v1124 = vadd.f32 %v794, %v1123
    %v1125 = vpop.f32.mrb[0].mxu0
    %v1126 = vpop.f32.mrb[0].mxu0
    %v1127 = vadd.f32 %v799, %v1126
    %v1128 = vpop.f32.mrb[0].mxu0
    %1129 = vmatprep.mubr.bf16.mxu0 %v962
    %1130 = vmatmul.mubr.bf16.gmra.mrb[0].mxu0 %v961
    %v1131 = vpop.f32.mrb[0].mxu0
    %v1132 = vadd.f32 %v804, %v1131
    %v1133 = vpop.f32.mrb[0].mxu0
    %v1134 = vpop.f32.mrb[0].mxu0
    %v1135 = vadd.f32 %v809, %v1134
    %v1136 = vpop.f32.mrb[0].mxu0
    %1137 = vmatprep.mubr.bf16.mxu0 %v964
    %1138 = vmatmul.mubr.bf16.gmra.mrb[0].mxu0 %v963
    %v1139 = vpop.f32.mrb[0].mxu0
    %v1140 = vadd.f32 %v814, %v1139
    %v1141 = vpop.f32.mrb[0].mxu0
    %v1142 = vpop.f32.mrb[0].mxu0
    %v1143 = vadd.f32 %v819, %v1142
    %v1144 = vpop.f32.mrb[0].mxu0
    %1145 = vmatprep.mubr.bf16.mxu0 %v966
    %1146 = vmatmul.mubr.bf16.gmra.mrb[0].mxu0 %v965
    %v1147 = vpop.f32.mrb[0].mxu0
    %v1148 = vadd.f32 %v824, %v1147
    %v1149 = vpop.f32.mrb[0].mxu0
    %v1150 = vpop.f32.mrb[0].mxu0
    %v1151 = vadd.f32 %v829, %v1150
    %v1152 = vpop.f32.mrb[0].mxu0
    %1153 = vmatprep.mubr.bf16.mxu0 %v968
    %1154 = vmatmul.mubr.bf16.gmra.mrb[0].mxu0 %v967
    %v1155 = vpop.f32.mrb[0].mxu0
    %v1156 = vadd.f32 %v834, %v1155
    %v1157 = vpop.f32.mrb[0].mxu0
    %v1158 = vpop.f32.mrb[0].mxu0
    %v1159 = vadd.f32 %v839, %v1158
    %v1160 = vpop.f32.mrb[0].mxu0
    %1161 = vdwg.mxu0
    %v1162 = vxor.u32 %v1036, 2147483648
    %v1163 = vxor.u32 %v1039, 2147483648
    %v1164 = vxor.u32 %v1044, 2147483648
    %v1165 = vxor.u32 %v1047, 2147483648
    %v1166 = vxor.u32 %v1052, 2147483648
    %v1167 = vxor.u32 %v1055, 2147483648
    %v1168 = vxor.u32 %v1060, 2147483648
    %v1169 = vxor.u32 %v1063, 2147483648
    %v1170 = vxor.u32 %v1068, 2147483648
    %v1171 = vxor.u32 %v1071, 2147483648
    %v1172 = vxor.u32 %v1076, 2147483648
    %v1173 = vxor.u32 %v1079, 2147483648
    %v1174 = vxor.u32 %v1084, 2147483648
    %v1175 = vxor.u32 %v1087, 2147483648
    %v1176 = vxor.u32 %v1092, 2147483648
    %v1177 = vxor.u32 %v1095, 2147483648
    %v1178 = vxor.u32 %v1100, 2147483648
    %v1179 = vxor.u32 %v1103, 2147483648
    %v1180 = vxor.u32 %v1108, 2147483648
    %v1181 = vxor.u32 %v1111, 2147483648
    %v1182 = vxor.u32 %v1116, 2147483648
    %v1183 = vxor.u32 %v1119, 2147483648
    %v1184 = vxor.u32 %v1124, 2147483648
    %v1185 = vxor.u32 %v1127, 2147483648
    %v1186 = vxor.u32 %v1132, 2147483648
    %v1187 = vxor.u32 %v1135, 2147483648
    %v1188 = vxor.u32 %v1140, 2147483648
    %v1189 = vxor.u32 %v1143, 2147483648
    %v1190 = vxor.u32 %v1148, 2147483648
    %v1191 = vxor.u32 %v1151, 2147483648
    %v1192 = vxor.u32 %v1156, 2147483648
    %v1193 = vxor.u32 %v1159, 2147483648
    %v1194 = vmul.f32 %v1162, 1.442695
    %v1195 = vpow.pop %v1194
    %v1196 = vmul.f32 %v1163, 1.442695
    %v1197 = vpow.pop %v1196
    %v1198 = vmul.f32 %v1164, 1.442695
    %v1199 = vpow.pop %v1198
    %v1200 = vmul.f32 %v1165, 1.442695
    %v1201 = vpow.pop %v1200
    %v1202 = vmul.f32 %v1166, 1.442695
    %v1203 = vpow.pop %v1202
    %v1204 = vmul.f32 %v1167, 1.442695
    %v1205 = vpow.pop %v1204
    %v1206 = vmul.f32 %v1168, 1.442695
    %v1207 = vpow.pop %v1206
    %v1208 = vmul.f32 %v1169, 1.442695
    %v1209 = vpow.pop %v1208
    %v1210 = vmul.f32 %v1170, 1.442695
    %v1211 = vpow.pop %v1210
    %v1212 = vmul.f32 %v1171, 1.442695
    %v1213 = vpow.pop %v1212
    %v1214 = vmul.f32 %v1172, 1.442695
    %v1215 = vpow.pop %v1214
    %v1216 = vmul.f32 %v1173, 1.442695
    %v1217 = vpow.pop %v1216
    %v1218 = vmul.f32 %v1174, 1.442695
    %v1219 = vpow.pop %v1218
    %v1220 = vmul.f32 %v1175, 1.442695
    %v1221 = vpow.pop %v1220
    %v1222 = vmul.f32 %v1176, 1.442695
    %v1223 = vpow.pop %v1222
    %v1224 = vmul.f32 %v1177, 1.442695
    %v1225 = vpow.pop %v1224
    %v1226 = vmul.f32 %v1178, 1.442695
    %v1227 = vpow.pop %v1226
    %v1228 = vmul.f32 %v1179, 1.442695
    %v1229 = vpow.pop %v1228
    %v1230 = vmul.f32 %v1180, 1.442695
    %v1231 = vpow.pop %v1230
    %v1232 = vmul.f32 %v1181, 1.442695
    %v1233 = vpow.pop %v1232
    %v1234 = vmul.f32 %v1182, 1.442695
    %v1235 = vpow.pop %v1234
    %v1236 = vmul.f32 %v1183, 1.442695
    %v1237 = vpow.pop %v1236
    %v1238 = vmul.f32 %v1184, 1.442695
    %v1239 = vpow.pop %v1238
    %v1240 = vmul.f32 %v1185, 1.442695
    %v1241 = vpow.pop %v1240
    %v1242 = vmul.f32 %v1186, 1.442695
    %v1243 = vpow.pop %v1242
    %v1244 = vmul.f32 %v1187, 1.442695
    %v1245 = vpow.pop %v1244
    %v1246 = vmul.f32 %v1188, 1.442695
    %v1247 = vpow.pop %v1246
    %v1248 = vmul.f32 %v1189, 1.442695
    %v1249 = vpow.pop %v1248
    %v1250 = vmul.f32 %v1190, 1.442695
    %v1251 = vpow.pop %v1250
    %v1252 = vmul.f32 %v1191, 1.442695
    %v1253 = vpow.pop %v1252
    %v1254 = vmul.f32 %v1192, 1.442695
    %v1255 = vpow.pop %v1254
    %v1256 = vmul.f32 %v1193, 1.442695
    %v1257 = vpow.pop %v1256
    %v1258 = vadd.f32 %v1195, 1.0
    %v1259 = vadd.f32 %v1197, 1.0
    %v1260 = vadd.f32 %v1199, 1.0
    %v1261 = vadd.f32 %v1201, 1.0
    %v1262 = vadd.f32 %v1203, 1.0
    %v1263 = vadd.f32 %v1205, 1.0
    %v1264 = vadd.f32 %v1207, 1.0
    %v1265 = vadd.f32 %v1209, 1.0
    %v1266 = vadd.f32 %v1211, 1.0
    %v1267 = vadd.f32 %v1213, 1.0
    %v1268 = vadd.f32 %v1215, 1.0
    %v1269 = vadd.f32 %v1217, 1.0
    %v1270 = vadd.f32 %v1219, 1.0
    %v1271 = vadd.f32 %v1221, 1.0
    %v1272 = vadd.f32 %v1223, 1.0
    %v1273 = vadd.f32 %v1225, 1.0
    %v1274 = vadd.f32 %v1227, 1.0
    %v1275 = vadd.f32 %v1229, 1.0
    %v1276 = vadd.f32 %v1231, 1.0
    %v1277 = vadd.f32 %v1233, 1.0
    %v1278 = vadd.f32 %v1235, 1.0
    %v1279 = vadd.f32 %v1237, 1.0
    %v1280 = vadd.f32 %v1239, 1.0
    %v1281 = vadd.f32 %v1241, 1.0
    %v1282 = vadd.f32 %v1243, 1.0
    %v1283 = vadd.f32 %v1245, 1.0
    %v1284 = vadd.f32 %v1247, 1.0
    %v1285 = vadd.f32 %v1249, 1.0
    %v1286 = vadd.f32 %v1251, 1.0
    %v1287 = vadd.f32 %v1253, 1.0
    %v1288 = vadd.f32 %v1255, 1.0
    %v1289 = vadd.f32 %v1257, 1.0
    %v1290 = vrcp.pop %v1258
    %v1291 = vmul.f32 1.0, %v1290
    %v1292 = vrcp.pop %v1259
    %v1293 = vmul.f32 1.0, %v1292
    %v1294 = vrcp.pop %v1260
    %v1295 = vmul.f32 1.0, %v1294
    %v1296 = vrcp.pop %v1261
    %v1297 = vmul.f32 1.0, %v1296
    %v1298 = vrcp.pop %v1262
    %v1299 = vmul.f32 1.0, %v1298
    %v1300 = vrcp.pop %v1263
    %v1301 = vmul.f32 1.0, %v1300
    %v1302 = vrcp.pop %v1264
    %v1303 = vmul.f32 1.0, %v1302
    %v1304 = vrcp.pop %v1265
    %v1305 = vmul.f32 1.0, %v1304
    %v1306 = vrcp.pop %v1266
    %v1307 = vmul.f32 1.0, %v1306
    %v1308 = vrcp.pop %v1267
    %v1309 = vmul.f32 1.0, %v1308
    %v1310 = vrcp.pop %v1268
    %v1311 = vmul.f32 1.0, %v1310
    %v1312 = vrcp.pop %v1269
    %v1313 = vmul.f32 1.0, %v1312
    %v1314 = vrcp.pop %v1270
    %v1315 = vmul.f32 1.0, %v1314
    %v1316 = vrcp.pop %v1271
    %v1317 = vmul.f32 1.0, %v1316
    %v1318 = vrcp.pop %v1272
    %v1319 = vmul.f32 1.0, %v1318
    %v1320 = vrcp.pop %v1273
    %v1321 = vmul.f32 1.0, %v1320
    %v1322 = vrcp.pop %v1274
    %v1323 = vmul.f32 1.0, %v1322
    %v1324 = vrcp.pop %v1275
    %v1325 = vmul.f32 1.0, %v1324
    %v1326 = vrcp.pop %v1276
    %v1327 = vmul.f32 1.0, %v1326
    %v1328 = vrcp.pop %v1277
    %v1329 = vmul.f32 1.0, %v1328
    %v1330 = vrcp.pop %v1278
    %v1331 = vmul.f32 1.0, %v1330
    %v1332 = vrcp.pop %v1279
    %v1333 = vmul.f32 1.0, %v1332
    %v1334 = vrcp.pop %v1280
    %v1335 = vmul.f32 1.0, %v1334
    %v1336 = vrcp.pop %v1281
    %v1337 = vmul.f32 1.0, %v1336
    %v1338 = vrcp.pop %v1282
    %v1339 = vmul.f32 1.0, %v1338
    %v1340 = vrcp.pop %v1283
    %v1341 = vmul.f32 1.0, %v1340
    %v1342 = vrcp.pop %v1284
    %v1343 = vmul.f32 1.0, %v1342
    %v1344 = vrcp.pop %v1285
    %v1345 = vmul.f32 1.0, %v1344
    %v1346 = vrcp.pop %v1286
    %v1347 = vmul.f32 1.0, %v1346
    %v1348 = vrcp.pop %v1287
    %v1349 = vmul.f32 1.0, %v1348
    %v1350 = vrcp.pop %v1288
    %v1351 = vmul.f32 1.0, %v1350
    %v1352 = vrcp.pop %v1289
    %v1353 = vmul.f32 1.0, %v1352
    %v1354 = vmul.f32 %v1036, %v1291
    %v1355 = vmul.f32 %v1039, %v1293
    %v1356 = vmul.f32 %v1044, %v1295
    %v1357 = vmul.f32 %v1047, %v1297
    %v1358 = vmul.f32 %v1052, %v1299
    %v1359 = vmul.f32 %v1055, %v1301
    %v1360 = vmul.f32 %v1060, %v1303
    %v1361 = vmul.f32 %v1063, %v1305
    %v1362 = vmul.f32 %v1068, %v1307
    %v1363 = vmul.f32 %v1071, %v1309
    %v1364 = vmul.f32 %v1076, %v1311
    %v1365 = vmul.f32 %v1079, %v1313
    %v1366 = vmul.f32 %v1084, %v1315
    %v1367 = vmul.f32 %v1087, %v1317
    %v1368 = vmul.f32 %v1092, %v1319
    %v1369 = vmul.f32 %v1095, %v1321
    %v1370 = vmul.f32 %v1100, %v1323
    %v1371 = vmul.f32 %v1103, %v1325
    %v1372 = vmul.f32 %v1108, %v1327
    %v1373 = vmul.f32 %v1111, %v1329
    %v1374 = vmul.f32 %v1116, %v1331
    %v1375 = vmul.f32 %v1119, %v1333
    %v1376 = vmul.f32 %v1124, %v1335
    %v1377 = vmul.f32 %v1127, %v1337
    %v1378 = vmul.f32 %v1132, %v1339
    %v1379 = vmul.f32 %v1135, %v1341
    %v1380 = vmul.f32 %v1140, %v1343
    %v1381 = vmul.f32 %v1143, %v1345
    %v1382 = vmul.f32 %v1148, %v1347
    %v1383 = vmul.f32 %v1151, %v1349
    %v1384 = vmul.f32 %v1156, %v1351
    %v1385 = vmul.f32 %v1159, %v1353
    %v1386 = vld [vmem:[%s6] sm:$0xff]
    %v1387 = vld [vmem:[%s6 + $0x8] sm:$0xff]
    %v1388 = vld [vmem:[%s6 + $0x10] sm:$0xff]
    %v1389 = vld [vmem:[%s6 + $0x18] sm:$0xff]
    %v1390 = vpack.c.bf16 %v1355, %v1354
    %v1391 = vpack.c.bf16 %v1357, %v1356
    %v1392 = vpack.c.bf16 %v1359, %v1358
    %v1393 = vpack.c.bf16 %v1361, %v1360
    %v1394 = vpack.c.bf16 %v1363, %v1362
    %v1395 = vpack.c.bf16 %v1365, %v1364
    %v1396 = vpack.c.bf16 %v1367, %v1366
    %v1397 = vpack.c.bf16 %v1369, %v1368
    %v1398 = vpack.c.bf16 %v1371, %v1370
    %v1399 = vpack.c.bf16 %v1373, %v1372
    %v1400 = vpack.c.bf16 %v1375, %v1374
    %v1401 = vpack.c.bf16 %v1377, %v1376
    %v1402 = vpack.c.bf16 %v1379, %v1378
    %v1403 = vpack.c.bf16 %v1381, %v1380
    %v1404 = vpack.c.bf16 %v1383, %v1382
    %v1405 = vpack.c.bf16 %v1385, %v1384
    %v1406 = vld [vmem:[%s7] sm:$0xff]
    %v1407 = vld [vmem:[%s7 + $0x8] sm:$0xff]
    %v1408 = vld [vmem:[%s7 + $0x10] sm:$0xff]
    %v1409 = vld [vmem:[%s7 + $0x18] sm:$0xff]
    %1411 = vset.pattern.permute.xlu0 0
    %1412 = vperm.xlu0 %1411, %v1406
    %v1413 = vpop.permute.xlu0 %1412
    %1416 = vset.pattern.permute.xlu0 0
    %1417 = vperm.xlu0 %1416, %v1407
    %v1418 = vpop.permute.xlu0 %1417
    %1421 = vset.pattern.permute.xlu0 0
    %1422 = vperm.xlu0 %1421, %v1408
    %v1423 = vpop.permute.xlu0 %1422
    %1426 = vset.pattern.permute.xlu0 0
    %1427 = vperm.xlu0 %1426, %v1409
    %v1428 = vpop.permute.xlu0 %1427
    %v1434 = vunpack.c.l.b16 %v1386
    %v1435 = vunpack.c.h.b16 %v1386
    %v1436 = vunpack.c.l.b16 %v1387
    %v1437 = vunpack.c.h.b16 %v1387
    %v1438 = vunpack.c.l.b16 %v1388
    %v1439 = vunpack.c.h.b16 %v1388
    %v1440 = vunpack.c.l.b16 %v1389
    %v1441 = vunpack.c.h.b16 %v1389
    %v1442 = vpack.c.b16 %v1436, %v1434
    %v1443 = vpack.c.b16 %v1437, %v1435
    %v1444 = vpack.c.b16 %v1440, %v1438
    %v1445 = vpack.c.b16 %v1441, %v1439
    %1450 = vmatprep.subr.bf16.mxu0 0
    %1451 = vmatpush1.bf16.msra.mxu0 %v1390
    %1452 = vmatprep.subr.bf16.mxu0 0
    %1453 = vmatpush1.bf16.msra.mxu0 %v1391
    %1454 = vmatprep.subr.bf16.mxu0 0
    %1455 = vmatpush1.bf16.msra.mxu0 %v1392
    %1456 = vmatprep.subr.bf16.mxu0 0
    %1457 = vmatpush1.bf16.msra.mxu0 %v1393
    %1458 = vmatprep.subr.bf16.mxu0 0
    %1459 = vmatpush1.bf16.msra.mxu0 %v1394
    %1460 = vmatprep.subr.bf16.mxu0 0
    %1461 = vmatpush1.bf16.msra.mxu0 %v1395
    %1462 = vmatprep.subr.bf16.mxu0 0
    %1463 = vmatpush1.bf16.msra.mxu0 %v1396
    %1464 = vmatprep.subr.bf16.mxu0 0
    %1465 = vmatpush1.bf16.msra.mxu0 %v1397
    %1466 = vmatprep.subr.bf16.mxu0 0
    %1467 = vmatpush1.bf16.msra.mxu0 %v1398
    %1468 = vmatprep.subr.bf16.mxu0 0
    %1469 = vmatpush1.bf16.msra.mxu0 %v1399
    %1470 = vmatprep.subr.bf16.mxu0 0
    %1471 = vmatpush1.bf16.msra.mxu0 %v1400
    %1472 = vmatprep.subr.bf16.mxu0 0
    %1473 = vmatpush1.bf16.msra.mxu0 %v1401
    %1474 = vmatprep.subr.bf16.mxu0 0
    %1475 = vmatpush1.bf16.msra.mxu0 %v1402
    %1476 = vmatprep.subr.bf16.mxu0 0
    %1477 = vmatpush1.bf16.msra.mxu0 %v1403
    %1478 = vmatprep.subr.bf16.mxu0 0
    %1479 = vmatpush1.bf16.msra.mxu0 %v1404
    %1480 = vmatprep.subr.bf16.mxu0 0
    %1481 = vmatpush1.bf16.msra.mxu0 %v1405
    %1482 = vmatprep.mubr.bf16.mxu0 %v1443
    %1483 = vmatmul.mubr.bf16.gmra.mrb[0].mxu0 %v1442
    %v1484 = vpop.f32.mrb[0].mxu0
    %v1485 = vadd.f32 %v1413, %v1484
    %v1486 = vpop.f32.mrb[0].mxu0
    %v1487 = vpop.f32.mrb[0].mxu0
    %v1488 = vadd.f32 %v1418, %v1487
    %v1489 = vpop.f32.mrb[0].mxu0
    %1490 = vmatprep.mubr.bf16.mxu0 %v1445
    %1491 = vmatmul.mubr.bf16.gmra.mrb[0].mxu0 %v1444
    %v1492 = vpop.f32.mrb[0].mxu0
    %v1493 = vadd.f32 %v1423, %v1492
    %v1494 = vpop.f32.mrb[0].mxu0
    %v1495 = vpop.f32.mrb[0].mxu0
    %v1496 = vadd.f32 %v1428, %v1495
    %v1497 = vpop.f32.mrb[0].mxu0
    %1498 = vdwg.mxu0
    %v1499 = vxor.u32 %v1485, 2147483648
    %v1500 = vxor.u32 %v1488, 2147483648
    %v1501 = vxor.u32 %v1493, 2147483648
    %v1502 = vxor.u32 %v1496, 2147483648
    %v1503 = vmul.f32 %v1499, 1.442695
    %v1504 = vpow.pop %v1503
    %v1505 = vmul.f32 %v1500, 1.442695
    %v1506 = vpow.pop %v1505
    %v1507 = vmul.f32 %v1501, 1.442695
    %v1508 = vpow.pop %v1507
    %v1509 = vmul.f32 %v1502, 1.442695
    %v1510 = vpow.pop %v1509
    %v1511 = vadd.f32 %v1504, 1.0
    %v1512 = vadd.f32 %v1506, 1.0
    %v1513 = vadd.f32 %v1508, 1.0
    %v1514 = vadd.f32 %v1510, 1.0
    %v1515 = vrcp.pop %v1511
    %v1516 = vmul.f32 1.0, %v1515
    %v1517 = vrcp.pop %v1512
    %v1518 = vmul.f32 1.0, %v1517
    %v1519 = vrcp.pop %v1513
    %v1520 = vmul.f32 1.0, %v1519
    %v1521 = vrcp.pop %v1514
    %v1522 = vmul.f32 1.0, %v1521
    %v1523 = vmul.f32 %v1485, %v1516
    %v1524 = vmul.f32 %v1488, %v1518
    %v1525 = vmul.f32 %v1493, %v1520
    %v1526 = vmul.f32 %v1496, %v1522
    %v1527 = vld [vmem:[%s1] sm:$0xf]
    %v1528 = vld [vmem:[%s1 + $0x4] sm:$0xf]
    %v1529 = vld [vmem:[%s1 + $0x8] sm:$0xf]
    %v1530 = vld [vmem:[%s1 + $0xc] sm:$0xf]
    %v1531 = vunpack.c.l.bf16 %v1527
    %v1532 = vunpack.c.l.bf16 %v1528
    %v1533 = vunpack.c.l.bf16 %v1529
    %v1534 = vunpack.c.l.bf16 %v1530
    %v1535 = vmul.f32 %v1523, %v1531
    %v1536 = vmul.f32 %v1524, %v1532
    %v1537 = vmul.f32 %v1525, %v1533
    %v1538 = vmul.f32 %v1526, %v1534
    %v1539 = vpack.c.bf16 %v1536, %v1535
    %v1540 = vpack.c.bf16 %v1538, %v1537
    %v1541 = vld [vmem:[%s8] sm:$0xf]
    %vm1542 = vcmask 261120
    %v1544 = vsel %vm1542, %v1541, 0
    %1546 = vmatprep.subr.bf16.mxu0 0
    %1547 = vmatpush1.bf16.msra.mxu0 %v1539
    %1548 = vmatprep.subr.bf16.mxu0 0
    %1549 = vmatpush1.bf16.msra.mxu0 %v1540
    %1550 = vmatprep.subr.bf16.mxu0 0
    %1551 = vmatpush1.bf16.msra.mxu0 0
    %1552 = vmatprep.subr.bf16.mxu0 0
    %1553 = vmatpush1.bf16.msra.mxu0 0
    %1554 = vmatprep.subr.bf16.mxu0 0
    %1555 = vmatpush1.bf16.msra.mxu0 0
    %1556 = vmatprep.subr.bf16.mxu0 0
    %1557 = vmatpush1.bf16.msra.mxu0 0
    %1558 = vmatprep.subr.bf16.mxu0 0
    %1559 = vmatpush1.bf16.msra.mxu0 0
    %1560 = vmatprep.subr.bf16.mxu0 0
    %1561 = vmatpush1.bf16.msra.mxu0 0
    %1562 = vmatprep.subr.bf16.mxu0 0
    %1563 = vmatpush1.bf16.msra.mxu0 0
    %1564 = vmatprep.subr.bf16.mxu0 0
    %1565 = vmatpush1.bf16.msra.mxu0 0
    %1566 = vmatprep.subr.bf16.mxu0 0
    %1567 = vmatpush1.bf16.msra.mxu0 0
    %1568 = vmatprep.subr.bf16.mxu0 0
    %1569 = vmatpush1.bf16.msra.mxu0 0
    %1570 = vmatprep.subr.bf16.mxu0 0
    %1571 = vmatpush1.bf16.msra.mxu0 0
    %1572 = vmatprep.subr.bf16.mxu0 0
    %1573 = vmatpush1.bf16.msra.mxu0 0
    %1574 = vmatprep.subr.bf16.mxu0 0
    %1575 = vmatpush1.bf16.msra.mxu0 0
    %1576 = vmatprep.subr.bf16.mxu0 0
    %1577 = vmatpush1.bf16.msra.mxu0 0
    %1578 = vmatprep.mubr.bf16.mxu0 0
    %1579 = vmatmul.mubr.bf16.gmra.mrb[0].mxu0 %v1544
    %v1580 = vpop.f32.mrb[0].mxu0
    %v1581 = vadd.f32 0.0, %v1580
    %v1582 = vpop.f32.mrb[0].mxu0
    %v1583 = vpop.f32.mrb[0].mxu0
    %v1584 = vpop.f32.mrb[0].mxu0
    %1585 = vdwg.mxu0
    %v1586 = vld [vmem:[%s2] sm:$0x1]
    %v1588 = vlaneseq
    %v1589 = vshrl.u32 %v1588, 7
    %v1590 = vsub.s32 0, %v1589
    %v1591 = vrot.slane %v1586, %v1590
    %v1593 = vmul.f32 %v1581, %v1591
    %v1594 = vld [vmem:[%s9] sm:$0xff]
    %1596 = vset.pattern.permute.xlu0 0
    %1597 = vperm.xlu0 %1596, %v1594
    %v1598 = vpop.permute.xlu0 %1597
    %v1600 = vadd.f32 %v1593, %v1598
    %1601 = vst [vmem:[#allocation2] sm:$0xff] %v1600
    // Predicated region
    $region42: #{tpu_custom_call.1} parent=1 // pred_check
      _
    $region43: #{tpu_custom_call.1} parent=1 // pred_check_branch
      %1603 = sbr.rel (0) target = $region45
    $region44: #{tpu_custom_call.1} parent=1 // pred_region
      %s1605 = ssub.s32 128, 128
      %1606 = vsyncadd [#allocation3], %s1605
      %s1608 = sshll.u32 [#allocation2], 4
      %s1609 = int_to_ptr.vmem [resolvable:$true] %s1608
      %1611 = dma.vmem_to_hbm [thread:$0]  %s1609, 128, %s10, [#allocation3]
    $region45: #{tpu_custom_call.1} parent=1 // pred_fallthru
      _
    // Predicated region
    $region46: #{tpu_custom_call.1} parent=1 // pred_check
      _
    $region47: #{tpu_custom_call.1} parent=1 // pred_check_branch
      %1613 = sbr.rel (0) target = $region49
    $region48: #{tpu_custom_call.1} parent=1 // pred_region
      %1614 = dma.done [#allocation3], 128
    $region49: #{tpu_custom_call.1} parent=1 // pred_fallthru
      _
    %1615 = vsyncpa [#allocation3], 1

</llo_original>
